<compile_context>
chip_gen: v6e
topology: v6e:2x2x1
jax: 0.10.0
libtpu: 0.0.40
codegen_flags: <defaults>
</compile_context>

<pallas_src>
import functools

import jax
import jax.numpy as jnp
from jax.experimental import pallas as pl
from jax.experimental.pallas import tpu as pltpu


def _round_up(a, b):
    return (a + b - 1) // b * b


def _mlp_kernel(scale_ref, x_ref, w1_ref, w2_ref, brow_ref, o_ref, acc_ref):
    """Grid = (M tiles, H chunks).  Weights fully VMEM-resident; chunk k picked via w_ref[k]."""
    k = pl.program_id(1)

    @pl.when(k == 0)
    def _():
        acc_ref[...] = jnp.zeros_like(acc_ref)

    w1c = w1_ref[k]            # (C, th)      -- resident, no per-M-tile re-streaming
    w2c = w2_ref[k]            # (th, C_out)  -- resident

    # fc1 chunk on the MXU, f32 accumulation.
    h = jnp.dot(x_ref[...], w1c, preferred_element_type=jnp.float32)
    # ReLU6 + square in f32.  StarReLU's scale/bias are hoisted to the final store:
    #   (s*r^2 + b) @ W2  ==  s*(r^2 @ W2) + b*colsum(W2)   (exact).
    h = jnp.clip(h, 0.0, 6.0)
    h = h * h
    # fc2 partial product, accumulated into the f32 VMEM scratch.
    acc_ref[...] += jnp.dot(h.astype(w2c.dtype), w2c, preferred_element_type=jnp.float32)

    @pl.when(k == pl.num_programs(1) - 1)
    def _():
        o_ref[...] = (scale_ref[0] * acc_ref[...] + brow_ref[...]).astype(o_ref.dtype)


@functools.partial(jax.jit, static_argnames=("tm", "th", "compute_dtype"))
def mlp_pallas(x, w1, w2, scale, bias, *, tm=512, th=1024, compute_dtype=jnp.bfloat16):
    """x: (B, N, C).  w1: (C, H), w2: (H, C_out) (transposed vs nn.Linear).  scale/bias: (1,)."""
    B, N, C = x.shape
    Cw, H = w1.shape
    H2, C_out = w2.shape
    assert Cw == C and H2 == H, "weight shapes must be (C, H) and (H, C_out)"

    M = B * N
    out_dtype = x.dtype
    cd = jnp.dtype(compute_dtype)

    # Hidden chunk must tile H exactly and satisfy the 128-lane rule; fall back to full H.
    if th > H or H % th != 0 or th % 128 != 0:
        th = H
    n_k = H // th

    # Keep >=2 M-tiles when tokens allow (megacore / v7x 2-TC sharding); never exceed M by much.
    if M >= 256:
        tm = min(tm, _round_up(pl.cdiv(M, 2), 128))
    else:
        tm = min(tm, _round_up(M, 16))
    n_m = pl.cdiv(M, tm)  # ragged M: last tile is partial, Pallas masks the boundary writes

    # bf16 MXU operands; weights reshaped so chunk k is a plain leading-dim index in the kernel.
    x2d = x.reshape(M, C).astype(cd)
    w1_3d = w1.astype(cd).reshape(C, n_k, th).transpose(1, 0, 2)   # [k] == w1[:, k*th:(k+1)*th]
    w2_3d = w2.astype(cd).reshape(n_k, th, C_out)                  # [k] == w2[k*th:(k+1)*th, :]
    scale_s = scale.reshape((1,)).astype(jnp.float32)
    # StarReLU bias folded into a per-output-column row (exact, see kernel comment).
    bias_row = (bias.reshape((1,)).astype(jnp.float32)[0]
                * jnp.sum(w2.astype(jnp.float32), axis=0)).reshape(1, C_out)

    csize = cd.itemsize
    osize = jnp.dtype(out_dtype).itemsize
    flops = 2 * M * C * H + 2 * M * H * C_out
    bytes_accessed = (M * C + C * H + H * C_out) * csize + 4 * C_out + M * C_out * osize

    # VMEM budget: double-buffered x/out tiles + (double-buffered) resident weights + f32
    # accumulator + (tm, th) f32 intermediate staging.  Capped at v7x's 64 MiB physical VMEM.
    vmem_need = ((2 * tm * C + 2 * C * H + 2 * H * C_out) * csize
                 + 2 * tm * C_out * osize + tm * C_out * 4 + 2 * C_out * 4 + 2 * tm * th * 4)
    vmem_limit = int(min(max(vmem_need * 5 // 4, 32 * 1024 * 1024), 64 * 1024 * 1024))

    out2d = pl.pallas_call(
        _mlp_kernel,
        out_shape=jax.ShapeDtypeStruct((M, C_out), out_dtype),
        grid_spec=pltpu.PrefetchScalarGridSpec(
            num_scalar_prefetch=0,
            grid=(n_m, n_k),
            in_specs=[
                pl.BlockSpec(memory_space=pltpu.SMEM),                   # StarReLU scale (1,)
                pl.BlockSpec((tm, C), lambda i, k: (i, 0)),              # x tile (reused over k)
                pl.BlockSpec((n_k, C, th), lambda i, k: (0, 0, 0)),      # w1, all chunks, resident
                pl.BlockSpec((n_k, th, C_out), lambda i, k: (0, 0, 0)),  # w2, all chunks, resident
                pl.BlockSpec((1, C_out), lambda i, k: (0, 0)),           # bias * colsum(w2)
            ],
            out_specs=pl.BlockSpec((tm, C_out), lambda i, k: (i, 0)),    # written on last k only
            scratch_shapes=[pltpu.VMEM((tm, C_out), jnp.float32)],       # fc2 accumulator
        ),
        compiler_params=pltpu.CompilerParams(
            dimension_semantics=("parallel", "arbitrary"),
            vmem_limit_bytes=vmem_limit),
        cost_estimate=pl.CostEstimate(flops=flops, transcendentals=0,
                                      bytes_accessed=bytes_accessed),
    )(scale_s, x2d, w1_3d, w2_3d, bias_row)

    return out2d.reshape(B, N, C_out)


def mlp_reference(x, w1, w2, scale, bias):
    h = jnp.einsum("bnc,ch->bnh", x, w1)
    h = scale[0] * jnp.clip(h, 0.0, 6.0) ** 2 + bias[0]
    return jnp.einsum("bnh,ho->bno", h, w2)


if __name__ == "__main__":
    # Small shapes consistent with the module: Mlp(dim=128, mlp_ratio=4) -> hidden=512, out=dim,
    # bias=False, drop=0.0, StarReLU defaults scale=1, bias=0.  B*N = 512 tokens.
    # tm=256 / th=256 so the demo exercises both grid axes (2 M-tiles x 2 H-chunks), the f32
    # accumulator and the dynamic chunk-index path.
    B, N, dim = 2, 256, 128
    hidden = 4 * dim

    key = jax.random.PRNGKey(0)
    kx, k1, k2 = jax.random.split(key, 3)
    x = jax.random.normal(kx, (B, N, dim), dtype=jnp.float32)
    # Deterministic synthetic weights, stored (in, out) = transpose of nn.Linear's (out, in).
    w1 = jax.random.normal(k1, (dim, hidden), dtype=jnp.float32) * 0.02
    w2 = jax.random.normal(k2, (hidden, dim), dtype=jnp.float32) * 0.02
    scale = jnp.ones((1,), dtype=jnp.float32)   # StarReLU defaults: scale_value=1.0, bias_value=0.0
    bias = jnp.zeros((1,), dtype=jnp.float32)

    out = mlp_pallas(x, w1, w2, scale, bias, tm=256, th=256)
    jax.block_until_ready(out)

    ref = mlp_reference(x, w1, w2, scale, bias)
    assert out.shape == (B, N, dim), out.shape
    max_err = float(jnp.max(jnp.abs(out - ref)))
    # bf16 MXU operands with f32 accumulation: tolerance reflects bf16 input/intermediate rounding.
    assert jnp.allclose(out, ref, atol=1e-2, rtol=2e-2), f"mismatch vs reference (max |err|={max_err})"

    print("KERNEL_OK")
</pallas_src>

<mosaic_0001>
module attributes {stable_mosaic.version = 11 : i64} {
  func.func @_mlp_kernel(%arg0: i32, %arg1: i32, %arg2: memref<1xf32, #tpu.memory_space<smem>>, %arg3: memref<256x128xbf16, #tpu.memory_space<vmem>>, %arg4: memref<2x128x256xbf16, #tpu.memory_space<vmem>>, %arg5: memref<2x256x128xbf16, #tpu.memory_space<vmem>>, %arg6: memref<1x128xf32, #tpu.memory_space<vmem>>, %arg7: memref<256x128xf32, #tpu.memory_space<vmem>>, %arg8: memref<256x128xf32, #tpu.memory_space<vmem>>) attributes {dimension_semantics = [#tpu.dimension_semantics<parallel>, #tpu.dimension_semantics<arbitrary>], iteration_bounds = array<i64: 2, 2>, scalar_prefetch = 0 : i64, scratch_operands = 1 : i64, tpu.core_type = #tpu.core_type<tc>, window_params = [{transform_indices = @transform_0, window_bounds = array<i64: 1>}, {transform_indices = @transform_1, window_bounds = array<i64: 256, 128>}, {pipeline_mode = #tpu.pipeline_mode<synchronous>, transform_indices = @transform_2, window_bounds = array<i64: 2, 128, 256>}, {pipeline_mode = #tpu.pipeline_mode<synchronous>, transform_indices = @transform_3, window_bounds = array<i64: 2, 256, 128>}, {pipeline_mode = #tpu.pipeline_mode<synchronous>, transform_indices = @transform_4, window_bounds = array<i64: 1, 128>}, {transform_indices = @transform_5, window_bounds = array<i64: 256, 128>}]} {
    %c0_i32 = arith.constant 0 : i32
    %0 = arith.cmpi eq, %arg1, %c0_i32 : i32
    %1 = arith.extui %0 : i1 to i32
    %c0_i32_0 = arith.constant 0 : i32
    %2 = arith.cmpi ne, %1, %c0_i32_0 : i32
    scf.if %2 {
      %cst_14 = arith.constant 0.000000e+00 : f32
      %24 = vector.broadcast %cst_14 : f32 to vector<256x128xf32>
      %c0_15 = arith.constant 0 : index
      %c0_16 = arith.constant 0 : index
      %25 = vector.load %arg8[%c0_15, %c0_16] : memref<256x128xf32, #tpu.memory_space<vmem>>, vector<256x128xf32>
      tpu.vector_store %arg8[%c0_15, %c0_16], %24 {strides = array<i32>} : memref<256x128xf32, #tpu.memory_space<vmem>>, vector<256x128xf32>,
    } else {
    }
    %3 = arith.index_cast %arg1 : i32 to index
    %c0 = arith.constant 0 : index
    %c0_1 = arith.constant 0 : index
    %4 = vector.load %arg4[%3, %c0, %c0_1] : memref<2x128x256xbf16, #tpu.memory_space<vmem>>, vector<1x128x256xbf16>
    %5 = vector.shape_cast %4 : vector<1x128x256xbf16> to vector<128x256xbf16>
    %6 = arith.index_cast %arg1 : i32 to index
    %c0_2 = arith.constant 0 : index
    %c0_3 = arith.constant 0 : index
    %7 = vector.load %arg5[%6, %c0_2, %c0_3] : memref<2x256x128xbf16, #tpu.memory_space<vmem>>, vector<1x256x128xbf16>
    %8 = vector.shape_cast %7 : vector<1x256x128xbf16> to vector<256x128xbf16>
    %c0_4 = arith.constant 0 : index
    %c0_5 = arith.constant 0 : index
    %9 = vector.load %arg3[%c0_4, %c0_5] : memref<256x128xbf16, #tpu.memory_space<vmem>>, vector<256x128xbf16>
    %cst = arith.constant dense<0.000000e+00> : vector<256x256xf32>
    %10 = tpu.matmul %9, %5, %cst {dimension_numbers = #tpu.dot_dimension_numbers<[1], [0], [0], [1], [0, 0, 1, 1], [], []>} : vector<256x128xbf16>, vector<128x256xbf16>, vector<256x256xf32> -> vector<256x256xf32>
    %cst_6 = arith.constant 0.000000e+00 : f32
    %cst_7 = arith.constant 6.000000e+00 : f32
    %11 = vector.broadcast %cst_6 : f32 to vector<256x256xf32>
    %12 = arith.maximumf %11, %10 : vector<256x256xf32>
    %13 = vector.broadcast %cst_7 : f32 to vector<256x256xf32>
    %14 = arith.minimumf %13, %12 : vector<256x256xf32>
    %15 = arith.mulf %14, %14 : vector<256x256xf32>
    %c0_8 = arith.constant 0 : index
    %c0_9 = arith.constant 0 : index
    %16 = vector.load %arg8[%c0_8, %c0_9] : memref<256x128xf32, #tpu.memory_space<vmem>>, vector<256x128xf32>
    %17 = arith.truncf %15 : vector<256x256xf32> to vector<256x256xbf16>
    %cst_10 = arith.constant dense<0.000000e+00> : vector<256x128xf32>
    %18 = tpu.matmul %17, %8, %cst_10 {dimension_numbers = #tpu.dot_dimension_numbers<[1], [0], [0], [1], [0, 0, 1, 1], [], []>} : vector<256x256xbf16>, vector<256x128xbf16>, vector<256x128xf32> -> vector<256x128xf32>
    %19 = arith.addf %16, %18 : vector<256x128xf32>
    %c0_11 = arith.constant 0 : index
    %c0_12 = arith.constant 0 : index
    %20 = vector.load %arg8[%c0_11, %c0_12] : memref<256x128xf32, #tpu.memory_space<vmem>>, vector<256x128xf32>
    tpu.vector_store %arg8[%c0_11, %c0_12], %19 {strides = array<i32>} : memref<256x128xf32, #tpu.memory_space<vmem>>, vector<256x128xf32>,
    %c1_i32 = arith.constant 1 : i32
    %21 = arith.cmpi eq, %arg1, %c1_i32 : i32
    %22 = arith.extui %21 : i1 to i32
    %c0_i32_13 = arith.constant 0 : i32
    %23 = arith.cmpi ne, %22, %c0_i32_13 : i32
    scf.if %23 {
      %c0_14 = arith.constant 0 : index
      %24 = memref.load %arg2[%c0_14] : memref<1xf32, #tpu.memory_space<smem>>
      %c0_15 = arith.constant 0 : index
      %c0_16 = arith.constant 0 : index
      %25 = vector.load %arg8[%c0_15, %c0_16] : memref<256x128xf32, #tpu.memory_space<vmem>>, vector<256x128xf32>
      %26 = vector.broadcast %24 : f32 to vector<256x128xf32>
      %27 = arith.mulf %26, %25 : vector<256x128xf32>
      %c0_17 = arith.constant 0 : index
      %c0_18 = arith.constant 0 : index
      %28 = vector.load %arg6[%c0_17, %c0_18] : memref<1x128xf32, #tpu.memory_space<vmem>>, vector<1x128xf32>
      %29 = vector.broadcast %28 : vector<1x128xf32> to vector<256x128xf32>
      %30 = arith.addf %27, %29 : vector<256x128xf32>
      %c0_19 = arith.constant 0 : index
      %c0_20 = arith.constant 0 : index
      %31 = vector.load %arg7[%c0_19, %c0_20] : memref<256x128xf32, #tpu.memory_space<vmem>>, vector<256x128xf32>
      tpu.vector_store %arg7[%c0_19, %c0_20], %30 {strides = array<i32>} : memref<256x128xf32, #tpu.memory_space<vmem>>, vector<256x128xf32>,
    } else {
    }
    return
  }
  func.func @transform_0(%arg0: i32, %arg1: i32) -> i32 {
    %c0_i32 = arith.constant 0 : i32
    %c0_i32_0 = arith.constant 0 : i32
    return %c0_i32 : i32
  }
  func.func @transform_1(%arg0: i32, %arg1: i32) -> (i32, i32) {
    %c0_i32 = arith.constant 0 : i32
    %c0_i32_0 = arith.constant 0 : i32
    return %arg0, %c0_i32 : i32, i32
  }
  func.func @transform_2(%arg0: i32, %arg1: i32) -> (i32, i32, i32) {
    %c0_i32 = arith.constant 0 : i32
    %c0_i32_0 = arith.constant 0 : i32
    %c0_i32_1 = arith.constant 0 : i32
    %c0_i32_2 = arith.constant 0 : i32
    return %c0_i32, %c0_i32_0, %c0_i32_1 : i32, i32, i32
  }
  func.func @transform_3(%arg0: i32, %arg1: i32) -> (i32, i32, i32) {
    %c0_i32 = arith.constant 0 : i32
    %c0_i32_0 = arith.constant 0 : i32
    %c0_i32_1 = arith.constant 0 : i32
    %c0_i32_2 = arith.constant 0 : i32
    return %c0_i32, %c0_i32_0, %c0_i32_1 : i32, i32, i32
  }
  func.func @transform_4(%arg0: i32, %arg1: i32) -> (i32, i32) {
    %c0_i32 = arith.constant 0 : i32
    %c0_i32_0 = arith.constant 0 : i32
    %c0_i32_1 = arith.constant 0 : i32
    return %c0_i32, %c0_i32_0 : i32, i32
  }
  func.func @transform_5(%arg0: i32, %arg1: i32) -> (i32, i32) {
    %c0_i32 = arith.constant 0 : i32
    %c0_i32_0 = arith.constant 0 : i32
    return %arg0, %c0_i32 : i32, i32
  }
}

</mosaic_0001>

<llo_original>
// kernel: mlp_pallas.1
$region0: #{mlp_pallas.1}
  #allocation0 [shape = 'u32[]', space=smem, size = 0x4, offset = 0x4, fixed_abs, tag = 'smem constant byte address 0x4 - core index']
  #allocation1 [shape = 'u32[144,128]{1,0:T(1,128)}', space=vmem, size = 0x12000, scoped, tag = 'internal scratch']
  #allocation2 [shape = 'f32[256,128]{1,0:T(8,128)}', space=vmem, size = 0x20000, scoped, tag = 'scratch operand']
  #allocation3 [shape = 'f32[1]{0:T(128)S(6)}', space=smem, size = 0x200, scoped, tag = 'scoped memory for mlp_pallas.1']
  %s0 = inlined_call_operand.<no memory space> [shape: f32[1], index: 0, kind: input, shape index: {}]
  %s1 = inlined_call_operand.vmem [shape: bf16[512,128], index: 1, kind: input, shape index: {}]
  %s2 = inlined_call_operand.vmem [shape: bf16[2,128,256], index: 2, kind: input, shape index: {}]
  %s3 = inlined_call_operand.vmem [shape: bf16[2,256,128], index: 3, kind: input, shape index: {}]
  %s4 = inlined_call_operand.vmem [shape: f32[1,128], index: 4, kind: input, shape index: {}]
  %s5 = inlined_call_operand.hbm [shape: f32[512,128], index: 5, kind: output, shape index: {}]
  %s6 = sld [smem:[#allocation0]]
  $region61: #{mlp_pallas.1} parent=0
    _
  %s8 = ssub.s32 1, %s6
  %s9 = scalar_select 0, %s8, %s6
  %10 = sst [smem:[#allocation3]] %s0
  $region1: #{mlp_pallas.1} parent=0
    #allocation4 [shape = 'u8[262144]{0}', space=vmem, size = 0x40000, scoped, tag = 'output window, operand 0']
    #allocation5 [shape = 's32[2]{0}', space=sflag, size = 0x8, scoped, tag = 'scoped memory for mlp_pallas.1']
    %11 = vsyncpa [#allocation5], 0
    %s12 = scalar_lea.sflag [#allocation5], 1
    %13 = vsyncpa %s12, 0
    loop: start=0, step=1, limit=6
    $region2: #{mlp_pallas.1} parent=1 // loop_pre_header
      _
    $region3: #{mlp_pallas.1} parent=1 // loop_header
      %s15 = sphi 0, %s19
      %p16 = scmp.ge.s32.totalorder %s15, 6
      %s22 = sphi 0, %s34
      %s23 = sphi 0, %s30
      %s24 = sphi 0, %s22
      %s25 = sphi 0, %s23
      %s26 = sphi 0, %s24
      %s27 = sphi 0, %s25
      %s35 = sphi 0, %s35
      %s37 = sphi 0, %s35
      %s38 = sphi 0, %s37
      %s52 = sphi 0, %s38
      %s58 = sphi 0, %s60
      %s61 = sphi 0, %s58
      %s62 = sphi 0, %s61
      %s78 = sphi 0, %s62
      %s82 = sphi 0, %s82
      %s84 = sphi 0, %s82
      %s85 = sphi 0, %s84
      %s99 = sphi 0, %s85
      %s103 = sphi 0, %s103
      %s105 = sphi 0, %s103
      %s106 = sphi 0, %s105
      %s120 = sphi 0, %s106
      %s124 = sphi 0, %s124
      %s126 = sphi 0, %s124
      %s127 = sphi 0, %s126
      %s141 = sphi 0, %s127
      %s147 = sphi 0, %s149
      %s150 = sphi 0, %s147
      %s151 = sphi 0, %s150
      %s167 = sphi 0, %s151
    $region4: #{mlp_pallas.1} parent=1 // loop_header_branch
      %18 = sbr.rel (%p16) target = $region8
    $region5: #{mlp_pallas.1} parent=1 // loop_body
      %s20 = ssub.s32 %s15, 1
      %s21 = ssub.s32 %s15, 2
      %s28 = sadd.s32 1, %s23
      %p29 = scmp.ge.s32.totalorder %s28, 2
      %s30 = scalar_select %p29, 0, %s28
      %s31 = sadd.s32 1, %s22
      %s32 = scalar_select %p29, %s31, %s22
      %p33 = scmp.ge.s32.totalorder %s32, 2
      %s34 = scalar_select %p33, 0, %s32
      %s36 = sadd.s32 %s35, 1
      %p39 = scmp.eq.s32.totalorder %s15, 3
      %p40 = scmp.ne.s32.totalorder %s35, %s37
      %p41 = scmp.eq.s32.totalorder %s15, 0
      %p42 = por %p40, %p41
      %p43 = scmp.ne.s32.totalorder %s35, %s37
      %p44 = scmp.eq.s32.totalorder %s20, 3
      %p45 = por %p43, %p44
      %p46 = scmp.ne.s32.totalorder %s37, %s38
      %p47 = scmp.eq.s32.totalorder %s20, 0
      %p48 = por %p46, %p47
      %p49 = scmp.ne.s32.totalorder %s37, %s38
      %p50 = scmp.eq.s32.totalorder %s21, 3
      %p51 = por %p49, %p50
      %p53 = scmp.ne.s32.totalorder %s38, %s52
      %p54 = scmp.eq.s32.totalorder %s21, 0
      %p55 = por %p53, %p54
      %s56 = ssub.s32 %s22, %s34
      %p57 = scmp.eq.s32.totalorder %s56, 0
      %s59 = sadd.s32 %s58, 1
      %s60 = scalar_select %p57, %s58, %s59
      %p63 = pneg %p57
      %p64 = scmp.eq.s32.totalorder %s15, 3
      %p65 = por %p63, %p64
      %p66 = scmp.ne.s32.totalorder %s58, %s61
      %p67 = scmp.eq.s32.totalorder %s15, 0
      %p68 = por %p66, %p67
      %p69 = scmp.ne.s32.totalorder %s58, %s61
      %p70 = scmp.eq.s32.totalorder %s20, 3
      %p71 = por %p69, %p70
      %p72 = scmp.ne.s32.totalorder %s61, %s62
      %p73 = scmp.eq.s32.totalorder %s20, 0
      %p74 = por %p72, %p73
      %p75 = scmp.ne.s32.totalorder %s61, %s62
      %p76 = scmp.eq.s32.totalorder %s21, 3
      %p77 = por %p75, %p76
      %p79 = scmp.ne.s32.totalorder %s62, %s78
      %p80 = scmp.eq.s32.totalorder %s21, 0
      %p81 = por %p79, %p80
      %s83 = sadd.s32 %s82, 1
      %p86 = scmp.eq.s32.totalorder %s15, 3
      %p87 = scmp.ne.s32.totalorder %s82, %s84
      %p88 = scmp.eq.s32.totalorder %s15, 0
      %p89 = por %p87, %p88
      %p90 = scmp.ne.s32.totalorder %s82, %s84
      %p91 = scmp.eq.s32.totalorder %s20, 3
      %p92 = por %p90, %p91
      %p93 = scmp.ne.s32.totalorder %s84, %s85
      %p94 = scmp.eq.s32.totalorder %s20, 0
      %p95 = por %p93, %p94
      %p96 = scmp.ne.s32.totalorder %s84, %s85
      %p97 = scmp.eq.s32.totalorder %s21, 3
      %p98 = por %p96, %p97
      %p100 = scmp.ne.s32.totalorder %s85, %s99
      %p101 = scmp.eq.s32.totalorder %s21, 0
      %p102 = por %p100, %p101
      %s104 = sadd.s32 %s103, 1
      %p107 = scmp.eq.s32.totalorder %s15, 3
      %p108 = scmp.ne.s32.totalorder %s103, %s105
      %p109 = scmp.eq.s32.totalorder %s15, 0
      %p110 = por %p108, %p109
      %p111 = scmp.ne.s32.totalorder %s103, %s105
      %p112 = scmp.eq.s32.totalorder %s20, 3
      %p113 = por %p111, %p112
      %p114 = scmp.ne.s32.totalorder %s105, %s106
      %p115 = scmp.eq.s32.totalorder %s20, 0
      %p116 = por %p114, %p115
      %p117 = scmp.ne.s32.totalorder %s105, %s106
      %p118 = scmp.eq.s32.totalorder %s21, 3
      %p119 = por %p117, %p118
      %p121 = scmp.ne.s32.totalorder %s106, %s120
      %p122 = scmp.eq.s32.totalorder %s21, 0
      %p123 = por %p121, %p122
      %s125 = sadd.s32 %s124, 1
      %p128 = scmp.eq.s32.totalorder %s15, 3
      %p129 = scmp.ne.s32.totalorder %s124, %s126
      %p130 = scmp.eq.s32.totalorder %s15, 0
      %p131 = por %p129, %p130
      %p132 = scmp.ne.s32.totalorder %s124, %s126
      %p133 = scmp.eq.s32.totalorder %s20, 3
      %p134 = por %p132, %p133
      %p135 = scmp.ne.s32.totalorder %s126, %s127
      %p136 = scmp.eq.s32.totalorder %s20, 0
      %p137 = por %p135, %p136
      %p138 = scmp.ne.s32.totalorder %s126, %s127
      %p139 = scmp.eq.s32.totalorder %s21, 3
      %p140 = por %p138, %p139
      %p142 = scmp.ne.s32.totalorder %s127, %s141
      %p143 = scmp.eq.s32.totalorder %s21, 0
      %p144 = por %p142, %p143
      %s145 = ssub.s32 %s22, %s34
      %p146 = scmp.eq.s32.totalorder %s145, 0
      %s148 = sadd.s32 %s147, 1
      %s149 = scalar_select %p146, %s147, %s148
      %p152 = pneg %p146
      %p153 = scmp.eq.s32.totalorder %s15, 3
      %p154 = por %p152, %p153
      %p155 = scmp.ne.s32.totalorder %s147, %s150
      %p156 = scmp.eq.s32.totalorder %s15, 0
      %p157 = por %p155, %p156
      %p158 = scmp.ne.s32.totalorder %s147, %s150
      %p159 = scmp.eq.s32.totalorder %s20, 3
      %p160 = por %p158, %p159
      %p161 = scmp.ne.s32.totalorder %s150, %s151
      %p162 = scmp.eq.s32.totalorder %s20, 0
      %p163 = por %p161, %p162
      %p164 = scmp.ne.s32.totalorder %s150, %s151
      %p165 = scmp.eq.s32.totalorder %s21, 3
      %p166 = por %p164, %p165
      %p168 = scmp.ne.s32.totalorder %s151, %s167
      %p169 = scmp.eq.s32.totalorder %s21, 0
      %p170 = por %p168, %p169
      %p171 = scmp.le.s32.totalorder 1, %s15
      %p172 = scmp.lt.s32.totalorder %s15, 5
      %p173 = pnand %p171, %p172
      %p174 = pneg %p173
      // Predicated region
      $region9: #{mlp_pallas.1} parent=5 // pred_check
        _
      $region10: #{mlp_pallas.1} parent=5 // pred_check_branch
        %176 = sbr.rel (%p173) target = $region12
      $region11: #{mlp_pallas.1} parent=5 // pred_region
        %s177 = ssub.s32 %s15, 1
        // Predicated region
        $region13: #{mlp_pallas.1} parent=11 // pred_check
          %p178 = pneg %p48
        $region14: #{mlp_pallas.1} parent=11 // pred_check_branch
          %180 = sbr.rel (%p178) target = $region16
        $region15: #{mlp_pallas.1} parent=11 // pred_region
          _
        $region16: #{mlp_pallas.1} parent=11 // pred_fallthru
          _
        // Predicated region
        $region17: #{mlp_pallas.1} parent=11 // pred_check
          %p181 = pneg %p95
        $region18: #{mlp_pallas.1} parent=11 // pred_check_branch
          %183 = sbr.rel (%p181) target = $region20
        $region19: #{mlp_pallas.1} parent=11 // pred_region
          _
        $region20: #{mlp_pallas.1} parent=11 // pred_fallthru
          _
        // Predicated region
        $region21: #{mlp_pallas.1} parent=11 // pred_check
          %p184 = pneg %p116
        $region22: #{mlp_pallas.1} parent=11 // pred_check_branch
          %186 = sbr.rel (%p184) target = $region24
        $region23: #{mlp_pallas.1} parent=11 // pred_region
          _
        $region24: #{mlp_pallas.1} parent=11 // pred_fallthru
          _
        // Predicated region
        $region25: #{mlp_pallas.1} parent=11 // pred_check
          %p187 = pneg %p137
        $region26: #{mlp_pallas.1} parent=11 // pred_check_branch
          %189 = sbr.rel (%p187) target = $region28
        $region27: #{mlp_pallas.1} parent=11 // pred_region
          _
        $region28: #{mlp_pallas.1} parent=11 // pred_fallthru
          _
      $region12: #{mlp_pallas.1} parent=5 // pred_fallthru
        _
      %p190 = scmp.lt.s32.totalorder %s15, 4
      // Predicated region
      $region29: #{mlp_pallas.1} parent=5 // pred_check
        %p191 = pneg %p190
      $region30: #{mlp_pallas.1} parent=5 // pred_check_branch
        %193 = sbr.rel (%p191) target = $region32
      $region31: #{mlp_pallas.1} parent=5 // pred_region
        // Predicated region
        $region33: #{mlp_pallas.1} parent=31 // pred_check
          %p194 = pneg %p68
        $region34: #{mlp_pallas.1} parent=31 // pred_check_branch
          %196 = sbr.rel (%p194) target = $region36
        $region35: #{mlp_pallas.1} parent=31 // pred_region
          %s197 = smul.u32 32, %s22
          %p198 = scmp.lt.s32.totalorder %s197, 63
          %s199 = scalar_select %p198, %s197, 63
          %s200 = smul.addr %s199, 4
          %s201 = scalar_lea.vmem %s1, %s200
          %s202 = smul.u32 32, %s22
        $region36: #{mlp_pallas.1} parent=31 // pred_fallthru
          _
      $region32: #{mlp_pallas.1} parent=5 // pred_fallthru
        _
      %p203 = scmp.le.s32.totalorder 1, %s15
      %p204 = scmp.lt.s32.totalorder %s15, 5
      %p205 = pnand %p203, %p204
      %p206 = pneg %p205
      // Predicated region
      $region37: #{mlp_pallas.1} parent=5 // pred_check
        _
      $region38: #{mlp_pallas.1} parent=5 // pred_check_branch
        %208 = sbr.rel (%p205) target = $region40
      $region39: #{mlp_pallas.1} parent=5 // pred_region
        %s209 = ssub.s32 %s15, 1
        %p210 = pneg %p48
        %p211 = pneg %p45
        %s212 = smul.u32 32, %s24
        %p213 = scmp.lt.s32.totalorder %s212, 63
        %s214 = scalar_select %p213, %s212, 63
        %s215 = smul.addr %s214, 4
        %s216 = scalar_lea.vmem %s1, %s215
        %p217 = pneg %p74
        %p218 = pneg %p71
        %p219 = pneg %p95
        %p220 = pneg %p92
        %p221 = pneg %p116
        %p222 = pneg %p113
        %p223 = pneg %p137
        %p224 = pneg %p134
        %p225 = pneg %p163
        %p226 = pneg %p160
        %s227 = sand.u32 %s150, 1
        %s228 = scalar_lea.sflag [#allocation5], %s227
        %s229 = sand.u32 %s150, 1
        %s230 = smul.addr %s229, 256
        %s231 = scalar_lea.vmem [#allocation4], %s230
        %s232 = smul.u32 32, %s24
        %p233 = scmp.lt.s32.totalorder %s232, 63
        %s234 = scalar_select %p233, %s232, 63
        %s235 = smul.addr %s234, 4
        %s236 = scalar_lea.vmem %s1, %s235
        %s237 = smul.u32 32, %s24
        %s238 = smul.u32 32, %s24
        %p240 = scmp.eq.s32.totalorder %s25, 0
        // Predicated region
        $region41: #{mlp_pallas.1} parent=39 // pred_check
          %p241 = pneg %p240
        $region42: #{mlp_pallas.1} parent=39 // pred_check_branch
          %243 = sbr.rel (%p241) target = $region44
        $region43: #{mlp_pallas.1} parent=39 // pred_region
          %244 = vst [vmem:[#allocation2] sm:$0xff] 0.0
          %245 = vst [vmem:[#allocation2 + $0x8] sm:$0xff] 0.0
          %246 = vst [vmem:[#allocation2 + $0x10] sm:$0xff] 0.0
          %247 = vst [vmem:[#allocation2 + $0x18] sm:$0xff] 0.0
          %248 = vst [vmem:[#allocation2 + $0x20] sm:$0xff] 0.0
          %249 = vst [vmem:[#allocation2 + $0x28] sm:$0xff] 0.0
          %250 = vst [vmem:[#allocation2 + $0x30] sm:$0xff] 0.0
          %251 = vst [vmem:[#allocation2 + $0x38] sm:$0xff] 0.0
          %252 = vst [vmem:[#allocation2 + $0x40] sm:$0xff] 0.0
          %253 = vst [vmem:[#allocation2 + $0x48] sm:$0xff] 0.0
          %254 = vst [vmem:[#allocation2 + $0x50] sm:$0xff] 0.0
          %255 = vst [vmem:[#allocation2 + $0x58] sm:$0xff] 0.0
          %256 = vst [vmem:[#allocation2 + $0x60] sm:$0xff] 0.0
          %257 = vst [vmem:[#allocation2 + $0x68] sm:$0xff] 0.0
          %258 = vst [vmem:[#allocation2 + $0x70] sm:$0xff] 0.0
          %259 = vst [vmem:[#allocation2 + $0x78] sm:$0xff] 0.0
          %260 = vst [vmem:[#allocation2 + $0x80] sm:$0xff] 0.0
          %261 = vst [vmem:[#allocation2 + $0x88] sm:$0xff] 0.0
          %262 = vst [vmem:[#allocation2 + $0x90] sm:$0xff] 0.0
          %263 = vst [vmem:[#allocation2 + $0x98] sm:$0xff] 0.0
          %264 = vst [vmem:[#allocation2 + $0xa0] sm:$0xff] 0.0
          %265 = vst [vmem:[#allocation2 + $0xa8] sm:$0xff] 0.0
          %266 = vst [vmem:[#allocation2 + $0xb0] sm:$0xff] 0.0
          %267 = vst [vmem:[#allocation2 + $0xb8] sm:$0xff] 0.0
          %268 = vst [vmem:[#allocation2 + $0xc0] sm:$0xff] 0.0
          %269 = vst [vmem:[#allocation2 + $0xc8] sm:$0xff] 0.0
          %270 = vst [vmem:[#allocation2 + $0xd0] sm:$0xff] 0.0
          %271 = vst [vmem:[#allocation2 + $0xd8] sm:$0xff] 0.0
          %272 = vst [vmem:[#allocation2 + $0xe0] sm:$0xff] 0.0
          %273 = vst [vmem:[#allocation2 + $0xe8] sm:$0xff] 0.0
          %274 = vst [vmem:[#allocation2 + $0xf0] sm:$0xff] 0.0
          %275 = vst [vmem:[#allocation2 + $0xf8] sm:$0xff] 0.0
        $region44: #{mlp_pallas.1} parent=39 // pred_fallthru
          _
        %s276 = smul.u32 %s25, 32
        %s277 = smul.addr %s276, 4
        %s278 = scalar_lea.vmem %s2, %s277
        %v279 = vld [vmem:[%s278] sm:$0xff]
        %v280 = vld [vmem:[%s278 + $0x8] sm:$0xff]
        %v281 = vld [vmem:[%s278 + $0x10] sm:$0xff]
        %v282 = vld [vmem:[%s278 + $0x18] sm:$0xff]
        %v283 = vld [vmem:[%s278 + $0x20] sm:$0xff]
        %v284 = vld [vmem:[%s278 + $0x28] sm:$0xff]
        %v285 = vld [vmem:[%s278 + $0x30] sm:$0xff]
        %v286 = vld [vmem:[%s278 + $0x38] sm:$0xff]
        %v287 = vld [vmem:[%s278 + $0x40] sm:$0xff]
        %v288 = vld [vmem:[%s278 + $0x48] sm:$0xff]
        %v289 = vld [vmem:[%s278 + $0x50] sm:$0xff]
        %v290 = vld [vmem:[%s278 + $0x58] sm:$0xff]
        %v291 = vld [vmem:[%s278 + $0x60] sm:$0xff]
        %v292 = vld [vmem:[%s278 + $0x68] sm:$0xff]
        %v293 = vld [vmem:[%s278 + $0x70] sm:$0xff]
        %v294 = vld [vmem:[%s278 + $0x78] sm:$0xff]
        %s295 = smul.addr %s276, 4
        %s296 = scalar_lea.vmem %s3, %s295
        %v297 = vld [vmem:[%s296] sm:$0xf]
        %v298 = vld [vmem:[%s296 + $0x4] sm:$0xf]
        %v299 = vld [vmem:[%s296 + $0x8] sm:$0xf]
        %v300 = vld [vmem:[%s296 + $0xc] sm:$0xf]
        %v301 = vld [vmem:[%s296 + $0x10] sm:$0xf]
        %v302 = vld [vmem:[%s296 + $0x14] sm:$0xf]
        %v303 = vld [vmem:[%s296 + $0x18] sm:$0xf]
        %v304 = vld [vmem:[%s296 + $0x1c] sm:$0xf]
        %v305 = vld [vmem:[%s296 + $0x20] sm:$0xf]
        %v306 = vld [vmem:[%s296 + $0x24] sm:$0xf]
        %v307 = vld [vmem:[%s296 + $0x28] sm:$0xf]
        %v308 = vld [vmem:[%s296 + $0x2c] sm:$0xf]
        %v309 = vld [vmem:[%s296 + $0x30] sm:$0xf]
        %v310 = vld [vmem:[%s296 + $0x34] sm:$0xf]
        %v311 = vld [vmem:[%s296 + $0x38] sm:$0xf]
        %v312 = vld [vmem:[%s296 + $0x3c] sm:$0xf]
        %v313 = vld [vmem:[%s296 + $0x40] sm:$0xf]
        %v314 = vld [vmem:[%s296 + $0x44] sm:$0xf]
        %v315 = vld [vmem:[%s296 + $0x48] sm:$0xf]
        %v316 = vld [vmem:[%s296 + $0x4c] sm:$0xf]
        %v317 = vld [vmem:[%s296 + $0x50] sm:$0xf]
        %v318 = vld [vmem:[%s296 + $0x54] sm:$0xf]
        %v319 = vld [vmem:[%s296 + $0x58] sm:$0xf]
        %v320 = vld [vmem:[%s296 + $0x5c] sm:$0xf]
        %v321 = vld [vmem:[%s296 + $0x60] sm:$0xf]
        %v322 = vld [vmem:[%s296 + $0x64] sm:$0xf]
        %v323 = vld [vmem:[%s296 + $0x68] sm:$0xf]
        %v324 = vld [vmem:[%s296 + $0x6c] sm:$0xf]
        %v325 = vld [vmem:[%s296 + $0x70] sm:$0xf]
        %v326 = vld [vmem:[%s296 + $0x74] sm:$0xf]
        %v327 = vld [vmem:[%s296 + $0x78] sm:$0xf]
        %v328 = vld [vmem:[%s296 + $0x7c] sm:$0xf]
        %v329 = vld [vmem:[%s236] sm:$0xf]
        %v330 = vld [vmem:[%s236 + $0x4] sm:$0xf]
        %v331 = vld [vmem:[%s236 + $0x8] sm:$0xf]
        %v332 = vld [vmem:[%s236 + $0xc] sm:$0xf]
        %v333 = vld [vmem:[%s236 + $0x10] sm:$0xf]
        %v334 = vld [vmem:[%s236 + $0x14] sm:$0xf]
        %v335 = vld [vmem:[%s236 + $0x18] sm:$0xf]
        %v336 = vld [vmem:[%s236 + $0x1c] sm:$0xf]
        %v337 = vld [vmem:[%s236 + $0x20] sm:$0xf]
        %v338 = vld [vmem:[%s236 + $0x24] sm:$0xf]
        %v339 = vld [vmem:[%s236 + $0x28] sm:$0xf]
        %v340 = vld [vmem:[%s236 + $0x2c] sm:$0xf]
        %v341 = vld [vmem:[%s236 + $0x30] sm:$0xf]
        %v342 = vld [vmem:[%s236 + $0x34] sm:$0xf]
        %v343 = vld [vmem:[%s236 + $0x38] sm:$0xf]
        %v344 = vld [vmem:[%s236 + $0x3c] sm:$0xf]
        %v345 = vld [vmem:[%s236 + $0x40] sm:$0xf]
        %v346 = vld [vmem:[%s236 + $0x44] sm:$0xf]
        %v347 = vld [vmem:[%s236 + $0x48] sm:$0xf]
        %v348 = vld [vmem:[%s236 + $0x4c] sm:$0xf]
        %v349 = vld [vmem:[%s236 + $0x50] sm:$0xf]
        %v350 = vld [vmem:[%s236 + $0x54] sm:$0xf]
        %v351 = vld [vmem:[%s236 + $0x58] sm:$0xf]
        %v352 = vld [vmem:[%s236 + $0x5c] sm:$0xf]
        %v353 = vld [vmem:[%s236 + $0x60] sm:$0xf]
        %v354 = vld [vmem:[%s236 + $0x64] sm:$0xf]
        %v355 = vld [vmem:[%s236 + $0x68] sm:$0xf]
        %v356 = vld [vmem:[%s236 + $0x6c] sm:$0xf]
        %v357 = vld [vmem:[%s236 + $0x70] sm:$0xf]
        %v358 = vld [vmem:[%s236 + $0x74] sm:$0xf]
        %v359 = vld [vmem:[%s236 + $0x78] sm:$0xf]
        %v360 = vld [vmem:[%s236 + $0x7c] sm:$0xf]
        %v393 = vunpack.c.l.b16 %v329
        %v394 = vunpack.c.l.b16 %v330
        %v395 = vunpack.c.l.b16 %v331
        %v396 = vunpack.c.l.b16 %v332
        %v397 = vunpack.c.l.b16 %v333
        %v398 = vunpack.c.l.b16 %v334
        %v399 = vunpack.c.l.b16 %v335
        %v400 = vunpack.c.l.b16 %v336
        %v401 = vunpack.c.l.b16 %v337
        %v402 = vunpack.c.l.b16 %v338
        %v403 = vunpack.c.l.b16 %v339
        %v404 = vunpack.c.l.b16 %v340
        %v405 = vunpack.c.l.b16 %v341
        %v406 = vunpack.c.l.b16 %v342
        %v407 = vunpack.c.l.b16 %v343
        %v408 = vunpack.c.l.b16 %v344
        %v409 = vunpack.c.l.b16 %v345
        %v410 = vunpack.c.l.b16 %v346
        %v411 = vunpack.c.l.b16 %v347
        %v412 = vunpack.c.l.b16 %v348
        %v413 = vunpack.c.l.b16 %v349
        %v414 = vunpack.c.l.b16 %v350
        %v415 = vunpack.c.l.b16 %v351
        %v416 = vunpack.c.l.b16 %v352
        %v417 = vunpack.c.l.b16 %v353
        %v418 = vunpack.c.l.b16 %v354
        %v419 = vunpack.c.l.b16 %v355
        %v420 = vunpack.c.l.b16 %v356
        %v421 = vunpack.c.l.b16 %v357
        %v422 = vunpack.c.l.b16 %v358
        %v423 = vunpack.c.l.b16 %v359
        %v424 = vunpack.c.l.b16 %v360
        %v425 = vpack.c.b16 %v394, %v393
        %v426 = vpack.c.b16 %v396, %v395
        %v427 = vpack.c.b16 %v398, %v397
        %v428 = vpack.c.b16 %v400, %v399
        %v429 = vpack.c.b16 %v402, %v401
        %v430 = vpack.c.b16 %v404, %v403
        %v431 = vpack.c.b16 %v406, %v405
        %v432 = vpack.c.b16 %v408, %v407
        %v433 = vpack.c.b16 %v410, %v409
        %v434 = vpack.c.b16 %v412, %v411
        %v435 = vpack.c.b16 %v414, %v413
        %v436 = vpack.c.b16 %v416, %v415
        %v437 = vpack.c.b16 %v418, %v417
        %v438 = vpack.c.b16 %v420, %v419
        %v439 = vpack.c.b16 %v422, %v421
        %v440 = vpack.c.b16 %v424, %v423
        %v473 = vunpack.c.l.b16 %v279
        %v474 = vunpack.c.h.b16 %v279
        %v475 = vunpack.c.l.b16 %v280
        %v476 = vunpack.c.h.b16 %v280
        %v477 = vunpack.c.l.b16 %v281
        %v478 = vunpack.c.h.b16 %v281
        %v479 = vunpack.c.l.b16 %v282
        %v480 = vunpack.c.h.b16 %v282
        %v481 = vunpack.c.l.b16 %v283
        %v482 = vunpack.c.h.b16 %v283
        %v483 = vunpack.c.l.b16 %v284
        %v484 = vunpack.c.h.b16 %v284
        %v485 = vunpack.c.l.b16 %v285
        %v486 = vunpack.c.h.b16 %v285
        %v487 = vunpack.c.l.b16 %v286
        %v488 = vunpack.c.h.b16 %v286
        %v489 = vunpack.c.l.b16 %v287
        %v490 = vunpack.c.h.b16 %v287
        %v491 = vunpack.c.l.b16 %v288
        %v492 = vunpack.c.h.b16 %v288
        %v493 = vunpack.c.l.b16 %v289
        %v494 = vunpack.c.h.b16 %v289
        %v495 = vunpack.c.l.b16 %v290
        %v496 = vunpack.c.h.b16 %v290
        %v497 = vunpack.c.l.b16 %v291
        %v498 = vunpack.c.h.b16 %v291
        %v499 = vunpack.c.l.b16 %v292
        %v500 = vunpack.c.h.b16 %v292
        %v501 = vunpack.c.l.b16 %v293
        %v502 = vunpack.c.h.b16 %v293
        %v503 = vunpack.c.l.b16 %v294
        %v504 = vunpack.c.h.b16 %v294
        %v505 = vpack.c.b16 %v475, %v473
        %v506 = vpack.c.b16 %v476, %v474
        %v507 = vpack.c.b16 %v479, %v477
        %v508 = vpack.c.b16 %v480, %v478
        %v509 = vpack.c.b16 %v483, %v481
        %v510 = vpack.c.b16 %v484, %v482
        %v511 = vpack.c.b16 %v487, %v485
        %v512 = vpack.c.b16 %v488, %v486
        %v513 = vpack.c.b16 %v491, %v489
        %v514 = vpack.c.b16 %v492, %v490
        %v515 = vpack.c.b16 %v495, %v493
        %v516 = vpack.c.b16 %v496, %v494
        %v517 = vpack.c.b16 %v499, %v497
        %v518 = vpack.c.b16 %v500, %v498
        %v519 = vpack.c.b16 %v503, %v501
        %v520 = vpack.c.b16 %v504, %v502
        %537 = vmatprep.subr.bf16.mxu0 %v520
        %538 = vmatpush1.bf16.msra.mxu0 %v519
        %539 = vmatprep.subr.bf16.mxu0 %v518
        %540 = vmatpush1.bf16.msra.mxu0 %v517
        %541 = vmatprep.subr.bf16.mxu0 %v516
        %542 = vmatpush1.bf16.msra.mxu0 %v515
        %543 = vmatprep.subr.bf16.mxu0 %v514
        %544 = vmatpush1.bf16.msra.mxu0 %v513
        %545 = vmatprep.subr.bf16.mxu0 %v512
        %546 = vmatpush1.bf16.msra.mxu0 %v511
        %547 = vmatprep.subr.bf16.mxu0 %v510
        %548 = vmatpush1.bf16.msra.mxu0 %v509
        %549 = vmatprep.subr.bf16.mxu0 %v508
        %550 = vmatpush1.bf16.msra.mxu0 %v507
        %551 = vmatprep.subr.bf16.mxu0 %v506
        %552 = vmatpush1.bf16.msra.mxu0 %v505
        %553 = vmatprep.subr.bf16.mxu0 0
        %554 = vmatpush2.bf16.msra.mxu0 0
        %555 = vmatprep.subr.bf16.mxu0 0
        %556 = vmatpush2.bf16.msra.mxu0 0
        %557 = vmatprep.subr.bf16.mxu0 0
        %558 = vmatpush2.bf16.msra.mxu0 0
        %559 = vmatprep.subr.bf16.mxu0 0
        %560 = vmatpush2.bf16.msra.mxu0 0
        %561 = vmatprep.subr.bf16.mxu0 0
        %562 = vmatpush2.bf16.msra.mxu0 0
        %563 = vmatprep.subr.bf16.mxu0 0
        %564 = vmatpush2.bf16.msra.mxu0 0
        %565 = vmatprep.subr.bf16.mxu0 0
        %566 = vmatpush2.bf16.msra.mxu0 0
        %567 = vmatprep.subr.bf16.mxu0 0
        %568 = vmatpush2.bf16.msra.mxu0 0
        %569 = vmatprep.mubr.bf16.mxu0 0
        %570 = vmatmul.mubr.bf16.gmra.mxu0 %v425
        %v571 = vpop.f32.mrf.mxu0
        %v572 = vadd.f32 0.0, %v571
        %v573 = vpop.f32.mrf.mxu0
        %v574 = vadd.f32 0.0, %v573
        %v575 = vpop.f32.mrf.mxu0
        %v576 = vadd.f32 0.0, %v575
        %v577 = vpop.f32.mrf.mxu0
        %v578 = vadd.f32 0.0, %v577
        %579 = vmatprep.mubr.bf16.mxu0 0
        %580 = vmatmul.mubr.bf16.gmra.mxu0 %v426
        %v581 = vpop.f32.mrf.mxu0
        %v582 = vadd.f32 0.0, %v581
        %v583 = vpop.f32.mrf.mxu0
        %v584 = vadd.f32 0.0, %v583
        %v585 = vpop.f32.mrf.mxu0
        %v586 = vadd.f32 0.0, %v585
        %v587 = vpop.f32.mrf.mxu0
        %v588 = vadd.f32 0.0, %v587
        %589 = vmatprep.mubr.bf16.mxu0 0
        %590 = vmatmul.mubr.bf16.gmra.mxu0 %v427
        %v591 = vpop.f32.mrf.mxu0
        %v592 = vadd.f32 0.0, %v591
        %v593 = vpop.f32.mrf.mxu0
        %v594 = vadd.f32 0.0, %v593
        %v595 = vpop.f32.mrf.mxu0
        %v596 = vadd.f32 0.0, %v595
        %v597 = vpop.f32.mrf.mxu0
        %v598 = vadd.f32 0.0, %v597
        %599 = vmatprep.mubr.bf16.mxu0 0
        %600 = vmatmul.mubr.bf16.gmra.mxu0 %v428
        %v601 = vpop.f32.mrf.mxu0
        %v602 = vadd.f32 0.0, %v601
        %v603 = vpop.f32.mrf.mxu0
        %v604 = vadd.f32 0.0, %v603
        %v605 = vpop.f32.mrf.mxu0
        %v606 = vadd.f32 0.0, %v605
        %v607 = vpop.f32.mrf.mxu0
        %v608 = vadd.f32 0.0, %v607
        %609 = vmatprep.mubr.bf16.mxu0 0
        %610 = vmatmul.mubr.bf16.gmra.mxu0 %v429
        %v611 = vpop.f32.mrf.mxu0
        %v612 = vadd.f32 0.0, %v611
        %v613 = vpop.f32.mrf.mxu0
        %v614 = vadd.f32 0.0, %v613
        %v615 = vpop.f32.mrf.mxu0
        %v616 = vadd.f32 0.0, %v615
        %v617 = vpop.f32.mrf.mxu0
        %v618 = vadd.f32 0.0, %v617
        %619 = vmatprep.mubr.bf16.mxu0 0
        %620 = vmatmul.mubr.bf16.gmra.mxu0 %v430
        %v621 = vpop.f32.mrf.mxu0
        %v622 = vadd.f32 0.0, %v621
        %v623 = vpop.f32.mrf.mxu0
        %v624 = vadd.f32 0.0, %v623
        %v625 = vpop.f32.mrf.mxu0
        %v626 = vadd.f32 0.0, %v625
        %v627 = vpop.f32.mrf.mxu0
        %v628 = vadd.f32 0.0, %v627
        %629 = vmatprep.mubr.bf16.mxu0 0
        %630 = vmatmul.mubr.bf16.gmra.mxu0 %v431
        %v631 = vpop.f32.mrf.mxu0
        %v632 = vadd.f32 0.0, %v631
        %v633 = vpop.f32.mrf.mxu0
        %v634 = vadd.f32 0.0, %v633
        %v635 = vpop.f32.mrf.mxu0
        %v636 = vadd.f32 0.0, %v635
        %v637 = vpop.f32.mrf.mxu0
        %v638 = vadd.f32 0.0, %v637
        %639 = vmatprep.mubr.bf16.mxu0 0
        %640 = vmatmul.mubr.bf16.gmra.mxu0 %v432
        %v641 = vpop.f32.mrf.mxu0
        %v642 = vadd.f32 0.0, %v641
        %v643 = vpop.f32.mrf.mxu0
        %v644 = vadd.f32 0.0, %v643
        %v645 = vpop.f32.mrf.mxu0
        %v646 = vadd.f32 0.0, %v645
        %v647 = vpop.f32.mrf.mxu0
        %v648 = vadd.f32 0.0, %v647
        %649 = vmatprep.mubr.bf16.mxu0 0
        %650 = vmatmul.mubr.bf16.gmra.mxu0 %v433
        %v651 = vpop.f32.mrf.mxu0
        %v652 = vadd.f32 0.0, %v651
        %v653 = vpop.f32.mrf.mxu0
        %v654 = vadd.f32 0.0, %v653
        %v655 = vpop.f32.mrf.mxu0
        %v656 = vadd.f32 0.0, %v655
        %v657 = vpop.f32.mrf.mxu0
        %v658 = vadd.f32 0.0, %v657
        %659 = vmatprep.mubr.bf16.mxu0 0
        %660 = vmatmul.mubr.bf16.gmra.mxu0 %v434
        %v661 = vpop.f32.mrf.mxu0
        %v662 = vadd.f32 0.0, %v661
        %v663 = vpop.f32.mrf.mxu0
        %v664 = vadd.f32 0.0, %v663
        %v665 = vpop.f32.mrf.mxu0
        %v666 = vadd.f32 0.0, %v665
        %v667 = vpop.f32.mrf.mxu0
        %v668 = vadd.f32 0.0, %v667
        %669 = vmatprep.mubr.bf16.mxu0 0
        %670 = vmatmul.mubr.bf16.gmra.mxu0 %v435
        %v671 = vpop.f32.mrf.mxu0
        %v672 = vadd.f32 0.0, %v671
        %v673 = vpop.f32.mrf.mxu0
        %v674 = vadd.f32 0.0, %v673
        %v675 = vpop.f32.mrf.mxu0
        %v676 = vadd.f32 0.0, %v675
        %v677 = vpop.f32.mrf.mxu0
        %v678 = vadd.f32 0.0, %v677
        %679 = vmatprep.mubr.bf16.mxu0 0
        %680 = vmatmul.mubr.bf16.gmra.mxu0 %v436
        %v681 = vpop.f32.mrf.mxu0
        %v682 = vadd.f32 0.0, %v681
        %v683 = vpop.f32.mrf.mxu0
        %v684 = vadd.f32 0.0, %v683
        %v685 = vpop.f32.mrf.mxu0
        %v686 = vadd.f32 0.0, %v685
        %v687 = vpop.f32.mrf.mxu0
        %v688 = vadd.f32 0.0, %v687
        %689 = vmatprep.mubr.bf16.mxu0 0
        %690 = vmatmul.mubr.bf16.gmra.mxu0 %v437
        %v691 = vpop.f32.mrf.mxu0
        %v692 = vadd.f32 0.0, %v691
        %v693 = vpop.f32.mrf.mxu0
        %v694 = vadd.f32 0.0, %v693
        %v695 = vpop.f32.mrf.mxu0
        %v696 = vadd.f32 0.0, %v695
        %v697 = vpop.f32.mrf.mxu0
        %v698 = vadd.f32 0.0, %v697
        %699 = vmatprep.mubr.bf16.mxu0 0
        %700 = vmatmul.mubr.bf16.gmra.mxu0 %v438
        %v701 = vpop.f32.mrf.mxu0
        %v702 = vadd.f32 0.0, %v701
        %v703 = vpop.f32.mrf.mxu0
        %v704 = vadd.f32 0.0, %v703
        %v705 = vpop.f32.mrf.mxu0
        %v706 = vadd.f32 0.0, %v705
        %v707 = vpop.f32.mrf.mxu0
        %v708 = vadd.f32 0.0, %v707
        %709 = vmatprep.mubr.bf16.mxu0 0
        %710 = vmatmul.mubr.bf16.gmra.mxu0 %v439
        %v711 = vpop.f32.mrf.mxu0
        %v712 = vadd.f32 0.0, %v711
        %v713 = vpop.f32.mrf.mxu0
        %v714 = vadd.f32 0.0, %v713
        %v715 = vpop.f32.mrf.mxu0
        %v716 = vadd.f32 0.0, %v715
        %v717 = vpop.f32.mrf.mxu0
        %v718 = vadd.f32 0.0, %v717
        %719 = vmatprep.mubr.bf16.mxu0 0
        %720 = vmatmul.mubr.bf16.gmra.mxu0 %v440
        %v721 = vpop.f32.mrf.mxu0
        %v722 = vadd.f32 0.0, %v721
        %v723 = vpop.f32.mrf.mxu0
        %v724 = vadd.f32 0.0, %v723
        %v725 = vpop.f32.mrf.mxu0
        %v726 = vadd.f32 0.0, %v725
        %v727 = vpop.f32.mrf.mxu0
        %v728 = vadd.f32 0.0, %v727
        %729 = vdwg.mxu0
        %v730 = vmax.f32 %v572, 0.0
        %v731 = vmax.f32 %v574, 0.0
        %v732 = vmax.f32 %v576, 0.0
        %v733 = vmax.f32 %v578, 0.0
        %v734 = vmax.f32 %v582, 0.0
        %v735 = vmax.f32 %v584, 0.0
        %v736 = vmax.f32 %v586, 0.0
        %v737 = vmax.f32 %v588, 0.0
        %v738 = vmax.f32 %v592, 0.0
        %v739 = vmax.f32 %v594, 0.0
        %v740 = vmax.f32 %v596, 0.0
        %v741 = vmax.f32 %v598, 0.0
        %v742 = vmax.f32 %v602, 0.0
        %v743 = vmax.f32 %v604, 0.0
        %v744 = vmax.f32 %v606, 0.0
        %v745 = vmax.f32 %v608, 0.0
        %v746 = vmax.f32 %v612, 0.0
        %v747 = vmax.f32 %v614, 0.0
        %v748 = vmax.f32 %v616, 0.0
        %v749 = vmax.f32 %v618, 0.0
        %v750 = vmax.f32 %v622, 0.0
        %v751 = vmax.f32 %v624, 0.0
        %v752 = vmax.f32 %v626, 0.0
        %v753 = vmax.f32 %v628, 0.0
        %v754 = vmax.f32 %v632, 0.0
        %v755 = vmax.f32 %v634, 0.0
        %v756 = vmax.f32 %v636, 0.0
        %v757 = vmax.f32 %v638, 0.0
        %v758 = vmax.f32 %v642, 0.0
        %v759 = vmax.f32 %v644, 0.0
        %v760 = vmax.f32 %v646, 0.0
        %v761 = vmax.f32 %v648, 0.0
        %v762 = vmax.f32 %v652, 0.0
        %v763 = vmax.f32 %v654, 0.0
        %v764 = vmax.f32 %v656, 0.0
        %v765 = vmax.f32 %v658, 0.0
        %v766 = vmax.f32 %v662, 0.0
        %v767 = vmax.f32 %v664, 0.0
        %v768 = vmax.f32 %v666, 0.0
        %v769 = vmax.f32 %v668, 0.0
        %v770 = vmax.f32 %v672, 0.0
        %v771 = vmax.f32 %v674, 0.0
        %v772 = vmax.f32 %v676, 0.0
        %v773 = vmax.f32 %v678, 0.0
        %v774 = vmax.f32 %v682, 0.0
        %v775 = vmax.f32 %v684, 0.0
        %v776 = vmax.f32 %v686, 0.0
        %v777 = vmax.f32 %v688, 0.0
        %v778 = vmax.f32 %v692, 0.0
        %v779 = vmax.f32 %v694, 0.0
        %v780 = vmax.f32 %v696, 0.0
        %v781 = vmax.f32 %v698, 0.0
        %v782 = vmax.f32 %v702, 0.0
        %v783 = vmax.f32 %v704, 0.0
        %v784 = vmax.f32 %v706, 0.0
        %v785 = vmax.f32 %v708, 0.0
        %v786 = vmax.f32 %v712, 0.0
        %v787 = vmax.f32 %v714, 0.0
        %v788 = vmax.f32 %v716, 0.0
        %v789 = vmax.f32 %v718, 0.0
        %v790 = vmax.f32 %v722, 0.0
        %v791 = vmax.f32 %v724, 0.0
        %v792 = vmax.f32 %v726, 0.0
        %v793 = vmax.f32 %v728, 0.0
        %v794 = vmin.f32 %v730, 6.0
        %v795 = vmin.f32 %v731, 6.0
        %v796 = vmin.f32 %v732, 6.0
        %v797 = vmin.f32 %v733, 6.0
        %v798 = vmin.f32 %v734, 6.0
        %v799 = vmin.f32 %v735, 6.0
        %v800 = vmin.f32 %v736, 6.0
        %v801 = vmin.f32 %v737, 6.0
        %v802 = vmin.f32 %v738, 6.0
        %v803 = vmin.f32 %v739, 6.0
        %v804 = vmin.f32 %v740, 6.0
        %v805 = vmin.f32 %v741, 6.0
        %v806 = vmin.f32 %v742, 6.0
        %v807 = vmin.f32 %v743, 6.0
        %v808 = vmin.f32 %v744, 6.0
        %v809 = vmin.f32 %v745, 6.0
        %v810 = vmin.f32 %v746, 6.0
        %v811 = vmin.f32 %v747, 6.0
        %v812 = vmin.f32 %v748, 6.0
        %v813 = vmin.f32 %v749, 6.0
        %v814 = vmin.f32 %v750, 6.0
        %v815 = vmin.f32 %v751, 6.0
        %v816 = vmin.f32 %v752, 6.0
        %v817 = vmin.f32 %v753, 6.0
        %v818 = vmin.f32 %v754, 6.0
        %v819 = vmin.f32 %v755, 6.0
        %v820 = vmin.f32 %v756, 6.0
        %v821 = vmin.f32 %v757, 6.0
        %v822 = vmin.f32 %v758, 6.0
        %v823 = vmin.f32 %v759, 6.0
        %v824 = vmin.f32 %v760, 6.0
        %v825 = vmin.f32 %v761, 6.0
        %v826 = vmin.f32 %v762, 6.0
        %v827 = vmin.f32 %v763, 6.0
        %v828 = vmin.f32 %v764, 6.0
        %v829 = vmin.f32 %v765, 6.0
        %v830 = vmin.f32 %v766, 6.0
        %v831 = vmin.f32 %v767, 6.0
        %v832 = vmin.f32 %v768, 6.0
        %v833 = vmin.f32 %v769, 6.0
        %v834 = vmin.f32 %v770, 6.0
        %v835 = vmin.f32 %v771, 6.0
        %v836 = vmin.f32 %v772, 6.0
        %v837 = vmin.f32 %v773, 6.0
        %v838 = vmin.f32 %v774, 6.0
        %v839 = vmin.f32 %v775, 6.0
        %v840 = vmin.f32 %v776, 6.0
        %v841 = vmin.f32 %v777, 6.0
        %v842 = vmin.f32 %v778, 6.0
        %v843 = vmin.f32 %v779, 6.0
        %v844 = vmin.f32 %v780, 6.0
        %v845 = vmin.f32 %v781, 6.0
        %v846 = vmin.f32 %v782, 6.0
        %v847 = vmin.f32 %v783, 6.0
        %v848 = vmin.f32 %v784, 6.0
        %v849 = vmin.f32 %v785, 6.0
        %v850 = vmin.f32 %v786, 6.0
        %v851 = vmin.f32 %v787, 6.0
        %v852 = vmin.f32 %v788, 6.0
        %v853 = vmin.f32 %v789, 6.0
        %v854 = vmin.f32 %v790, 6.0
        %v855 = vmin.f32 %v791, 6.0
        %v856 = vmin.f32 %v792, 6.0
        %v857 = vmin.f32 %v793, 6.0
        %v858 = vmul.f32 %v794, %v794
        %v859 = vmul.f32 %v795, %v795
        %v860 = vmul.f32 %v796, %v796
        %v861 = vmul.f32 %v797, %v797
        %v862 = vmul.f32 %v798, %v798
        %v863 = vmul.f32 %v799, %v799
        %v864 = vmul.f32 %v800, %v800
        %v865 = vmul.f32 %v801, %v801
        %v866 = vmul.f32 %v802, %v802
        %v867 = vmul.f32 %v803, %v803
        %v868 = vmul.f32 %v804, %v804
        %v869 = vmul.f32 %v805, %v805
        %v870 = vmul.f32 %v806, %v806
        %v871 = vmul.f32 %v807, %v807
        %v872 = vmul.f32 %v808, %v808
        %v873 = vmul.f32 %v809, %v809
        %v874 = vmul.f32 %v810, %v810
        %v875 = vmul.f32 %v811, %v811
        %v876 = vmul.f32 %v812, %v812
        %v877 = vmul.f32 %v813, %v813
        %v878 = vmul.f32 %v814, %v814
        %v879 = vmul.f32 %v815, %v815
        %v880 = vmul.f32 %v816, %v816
        %v881 = vmul.f32 %v817, %v817
        %v882 = vmul.f32 %v818, %v818
        %v883 = vmul.f32 %v819, %v819
        %v884 = vmul.f32 %v820, %v820
        %v885 = vmul.f32 %v821, %v821
        %v886 = vmul.f32 %v822, %v822
        %v887 = vmul.f32 %v823, %v823
        %v888 = vmul.f32 %v824, %v824
        %v889 = vmul.f32 %v825, %v825
        %v890 = vmul.f32 %v826, %v826
        %v891 = vmul.f32 %v827, %v827
        %v892 = vmul.f32 %v828, %v828
        %v893 = vmul.f32 %v829, %v829
        %v894 = vmul.f32 %v830, %v830
        %v895 = vmul.f32 %v831, %v831
        %v896 = vmul.f32 %v832, %v832
        %v897 = vmul.f32 %v833, %v833
        %v898 = vmul.f32 %v834, %v834
        %v899 = vmul.f32 %v835, %v835
        %v900 = vmul.f32 %v836, %v836
        %v901 = vmul.f32 %v837, %v837
        %v902 = vmul.f32 %v838, %v838
        %v903 = vmul.f32 %v839, %v839
        %v904 = vmul.f32 %v840, %v840
        %v905 = vmul.f32 %v841, %v841
        %v906 = vmul.f32 %v842, %v842
        %v907 = vmul.f32 %v843, %v843
        %v908 = vmul.f32 %v844, %v844
        %v909 = vmul.f32 %v845, %v845
        %v910 = vmul.f32 %v846, %v846
        %v911 = vmul.f32 %v847, %v847
        %v912 = vmul.f32 %v848, %v848
        %v913 = vmul.f32 %v849, %v849
        %v914 = vmul.f32 %v850, %v850
        %v915 = vmul.f32 %v851, %v851
        %v916 = vmul.f32 %v852, %v852
        %v917 = vmul.f32 %v853, %v853
        %v918 = vmul.f32 %v854, %v854
        %v919 = vmul.f32 %v855, %v855
        %v920 = vmul.f32 %v856, %v856
        %v921 = vmul.f32 %v857, %v857
        %v922 = vld [vmem:[#allocation2] sm:$0xff]
        %v923 = vld [vmem:[#allocation2 + $0x8] sm:$0xff]
        %v924 = vld [vmem:[#allocation2 + $0x10] sm:$0xff]
        %v925 = vld [vmem:[#allocation2 + $0x18] sm:$0xff]
        %v926 = vld [vmem:[#allocation2 + $0x20] sm:$0xff]
        %v927 = vld [vmem:[#allocation2 + $0x28] sm:$0xff]
        %v928 = vld [vmem:[#allocation2 + $0x30] sm:$0xff]
        %v929 = vld [vmem:[#allocation2 + $0x38] sm:$0xff]
        %v930 = vld [vmem:[#allocation2 + $0x40] sm:$0xff]
        %v931 = vld [vmem:[#allocation2 + $0x48] sm:$0xff]
        %v932 = vld [vmem:[#allocation2 + $0x50] sm:$0xff]
        %v933 = vld [vmem:[#allocation2 + $0x58] sm:$0xff]
        %v934 = vld [vmem:[#allocation2 + $0x60] sm:$0xff]
        %v935 = vld [vmem:[#allocation2 + $0x68] sm:$0xff]
        %v936 = vld [vmem:[#allocation2 + $0x70] sm:$0xff]
        %v937 = vld [vmem:[#allocation2 + $0x78] sm:$0xff]
        %v938 = vld [vmem:[#allocation2 + $0x80] sm:$0xff]
        %v939 = vld [vmem:[#allocation2 + $0x88] sm:$0xff]
        %v940 = vld [vmem:[#allocation2 + $0x90] sm:$0xff]
        %v941 = vld [vmem:[#allocation2 + $0x98] sm:$0xff]
        %v942 = vld [vmem:[#allocation2 + $0xa0] sm:$0xff]
        %v943 = vld [vmem:[#allocation2 + $0xa8] sm:$0xff]
        %v944 = vld [vmem:[#allocation2 + $0xb0] sm:$0xff]
        %v945 = vld [vmem:[#allocation2 + $0xb8] sm:$0xff]
        %v946 = vld [vmem:[#allocation2 + $0xc0] sm:$0xff]
        %v947 = vld [vmem:[#allocation2 + $0xc8] sm:$0xff]
        %v948 = vld [vmem:[#allocation2 + $0xd0] sm:$0xff]
        %v949 = vld [vmem:[#allocation2 + $0xd8] sm:$0xff]
        %v950 = vld [vmem:[#allocation2 + $0xe0] sm:$0xff]
        %v951 = vld [vmem:[#allocation2 + $0xe8] sm:$0xff]
        %v952 = vld [vmem:[#allocation2 + $0xf0] sm:$0xff]
        %v953 = vld [vmem:[#allocation2 + $0xf8] sm:$0xff]
        %v954 = vpack.c.bf16 %v860, %v858
        %v955 = vpack.c.bf16 %v861, %v859
        %v956 = vpack.c.bf16 %v864, %v862
        %v957 = vpack.c.bf16 %v865, %v863
        %v958 = vpack.c.bf16 %v868, %v866
        %v959 = vpack.c.bf16 %v869, %v867
        %v960 = vpack.c.bf16 %v872, %v870
        %v961 = vpack.c.bf16 %v873, %v871
        %v962 = vpack.c.bf16 %v876, %v874
        %v963 = vpack.c.bf16 %v877, %v875
        %v964 = vpack.c.bf16 %v880, %v878
        %v965 = vpack.c.bf16 %v881, %v879
        %v966 = vpack.c.bf16 %v884, %v882
        %v967 = vpack.c.bf16 %v885, %v883
        %v968 = vpack.c.bf16 %v888, %v886
        %v969 = vpack.c.bf16 %v889, %v887
        %v970 = vpack.c.bf16 %v892, %v890
        %v971 = vpack.c.bf16 %v893, %v891
        %v972 = vpack.c.bf16 %v896, %v894
        %v973 = vpack.c.bf16 %v897, %v895
        %v974 = vpack.c.bf16 %v900, %v898
        %v975 = vpack.c.bf16 %v901, %v899
        %v976 = vpack.c.bf16 %v904, %v902
        %v977 = vpack.c.bf16 %v905, %v903
        %v978 = vpack.c.bf16 %v908, %v906
        %v979 = vpack.c.bf16 %v909, %v907
        %v980 = vpack.c.bf16 %v912, %v910
        %v981 = vpack.c.bf16 %v913, %v911
        %v982 = vpack.c.bf16 %v916, %v914
        %v983 = vpack.c.bf16 %v917, %v915
        %v984 = vpack.c.bf16 %v920, %v918
        %v985 = vpack.c.bf16 %v921, %v919
        %v1018 = vunpack.c.l.b16 %v297
        %v1019 = vunpack.c.l.b16 %v298
        %v1020 = vunpack.c.l.b16 %v299
        %v1021 = vunpack.c.l.b16 %v300
        %v1022 = vunpack.c.l.b16 %v301
        %v1023 = vunpack.c.l.b16 %v302
        %v1024 = vunpack.c.l.b16 %v303
        %v1025 = vunpack.c.l.b16 %v304
        %v1026 = vunpack.c.l.b16 %v305
        %v1027 = vunpack.c.l.b16 %v306
        %v1028 = vunpack.c.l.b16 %v307
        %v1029 = vunpack.c.l.b16 %v308
        %v1030 = vunpack.c.l.b16 %v309
        %v1031 = vunpack.c.l.b16 %v310
        %v1032 = vunpack.c.l.b16 %v311
        %v1033 = vunpack.c.l.b16 %v312
        %v1034 = vunpack.c.l.b16 %v313
        %v1035 = vunpack.c.l.b16 %v314
        %v1036 = vunpack.c.l.b16 %v315
        %v1037 = vunpack.c.l.b16 %v316
        %v1038 = vunpack.c.l.b16 %v317
        %v1039 = vunpack.c.l.b16 %v318
        %v1040 = vunpack.c.l.b16 %v319
        %v1041 = vunpack.c.l.b16 %v320
        %v1042 = vunpack.c.l.b16 %v321
        %v1043 = vunpack.c.l.b16 %v322
        %v1044 = vunpack.c.l.b16 %v323
        %v1045 = vunpack.c.l.b16 %v324
        %v1046 = vunpack.c.l.b16 %v325
        %v1047 = vunpack.c.l.b16 %v326
        %v1048 = vunpack.c.l.b16 %v327
        %v1049 = vunpack.c.l.b16 %v328
        %v1050 = vpack.c.b16 %v1019, %v1018
        %v1051 = vpack.c.b16 %v1021, %v1020
        %v1052 = vpack.c.b16 %v1023, %v1022
        %v1053 = vpack.c.b16 %v1025, %v1024
        %v1054 = vpack.c.b16 %v1027, %v1026
        %v1055 = vpack.c.b16 %v1029, %v1028
        %v1056 = vpack.c.b16 %v1031, %v1030
        %v1057 = vpack.c.b16 %v1033, %v1032
        %v1058 = vpack.c.b16 %v1035, %v1034
        %v1059 = vpack.c.b16 %v1037, %v1036
        %v1060 = vpack.c.b16 %v1039, %v1038
        %v1061 = vpack.c.b16 %v1041, %v1040
        %v1062 = vpack.c.b16 %v1043, %v1042
        %v1063 = vpack.c.b16 %v1045, %v1044
        %v1064 = vpack.c.b16 %v1047, %v1046
        %v1065 = vpack.c.b16 %v1049, %v1048
        %1082 = vmatprep.subr.bf16.mxu0 0
        %1083 = vmatpush1.bf16.msra.mxu0 %v1057
        %1084 = vmatprep.subr.bf16.mxu0 0
        %1085 = vmatpush1.bf16.msra.mxu0 %v1056
        %1086 = vmatprep.subr.bf16.mxu0 0
        %1087 = vmatpush1.bf16.msra.mxu0 %v1055
        %1088 = vmatprep.subr.bf16.mxu0 0
        %1089 = vmatpush1.bf16.msra.mxu0 %v1054
        %1090 = vmatprep.subr.bf16.mxu0 0
        %1091 = vmatpush1.bf16.msra.mxu0 %v1053
        %1092 = vmatprep.subr.bf16.mxu0 0
        %1093 = vmatpush1.bf16.msra.mxu0 %v1052
        %1094 = vmatprep.subr.bf16.mxu0 0
        %1095 = vmatpush1.bf16.msra.mxu0 %v1051
        %1096 = vmatprep.subr.bf16.mxu0 0
        %1097 = vmatpush1.bf16.msra.mxu0 %v1050
        %1098 = vmatprep.subr.bf16.mxu0 0
        %1099 = vmatpush2.bf16.msra.mxu0 %v1065
        %1100 = vmatprep.subr.bf16.mxu0 0
        %1101 = vmatpush2.bf16.msra.mxu0 %v1064
        %1102 = vmatprep.subr.bf16.mxu0 0
        %1103 = vmatpush2.bf16.msra.mxu0 %v1063
        %1104 = vmatprep.subr.bf16.mxu0 0
        %1105 = vmatpush2.bf16.msra.mxu0 %v1062
        %1106 = vmatprep.subr.bf16.mxu0 0
        %1107 = vmatpush2.bf16.msra.mxu0 %v1061
        %1108 = vmatprep.subr.bf16.mxu0 0
        %1109 = vmatpush2.bf16.msra.mxu0 %v1060
        %1110 = vmatprep.subr.bf16.mxu0 0
        %1111 = vmatpush2.bf16.msra.mxu0 %v1059
        %1112 = vmatprep.subr.bf16.mxu0 0
        %1113 = vmatpush2.bf16.msra.mxu0 %v1058
        %1114 = vmatprep.mubr.bf16.mxu0 %v955
        %1115 = vmatmul.mubr.bf16.gmra.mxu0 %v954
        %v1116 = vpop.f32.mrf.mxu0
        %v1117 = vadd.f32 0.0, %v1116
        %v1118 = vpop.f32.mrf.mxu0
        %v1119 = vpop.f32.mrf.mxu0
        %v1120 = vadd.f32 0.0, %v1119
        %v1121 = vpop.f32.mrf.mxu0
        %1122 = vmatprep.mubr.bf16.mxu0 %v957
        %1123 = vmatmul.mubr.bf16.gmra.mxu0 %v956
        %v1124 = vpop.f32.mrf.mxu0
        %v1125 = vadd.f32 0.0, %v1124
        %v1126 = vpop.f32.mrf.mxu0
        %v1127 = vpop.f32.mrf.mxu0
        %v1128 = vadd.f32 0.0, %v1127
        %v1129 = vpop.f32.mrf.mxu0
        %1130 = vmatprep.mubr.bf16.mxu0 %v959
        %1131 = vmatmul.mubr.bf16.gmra.mxu0 %v958
        %v1132 = vpop.f32.mrf.mxu0
        %v1133 = vadd.f32 0.0, %v1132
        %v1134 = vpop.f32.mrf.mxu0
        %v1135 = vpop.f32.mrf.mxu0
        %v1136 = vadd.f32 0.0, %v1135
        %v1137 = vpop.f32.mrf.mxu0
        %1138 = vmatprep.mubr.bf16.mxu0 %v961
        %1139 = vmatmul.mubr.bf16.gmra.mxu0 %v960
        %v1140 = vpop.f32.mrf.mxu0
        %v1141 = vadd.f32 0.0, %v1140
        %v1142 = vpop.f32.mrf.mxu0
        %v1143 = vpop.f32.mrf.mxu0
        %v1144 = vadd.f32 0.0, %v1143
        %v1145 = vpop.f32.mrf.mxu0
        %1146 = vmatprep.mubr.bf16.mxu0 %v963
        %1147 = vmatmul.mubr.bf16.gmra.mxu0 %v962
        %v1148 = vpop.f32.mrf.mxu0
        %v1149 = vadd.f32 0.0, %v1148
        %v1150 = vpop.f32.mrf.mxu0
        %v1151 = vpop.f32.mrf.mxu0
        %v1152 = vadd.f32 0.0, %v1151
        %v1153 = vpop.f32.mrf.mxu0
        %1154 = vmatprep.mubr.bf16.mxu0 %v965
        %1155 = vmatmul.mubr.bf16.gmra.mxu0 %v964
        %v1156 = vpop.f32.mrf.mxu0
        %v1157 = vadd.f32 0.0, %v1156
        %v1158 = vpop.f32.mrf.mxu0
        %v1159 = vpop.f32.mrf.mxu0
        %v1160 = vadd.f32 0.0, %v1159
        %v1161 = vpop.f32.mrf.mxu0
        %1162 = vmatprep.mubr.bf16.mxu0 %v967
        %1163 = vmatmul.mubr.bf16.gmra.mxu0 %v966
        %v1164 = vpop.f32.mrf.mxu0
        %v1165 = vadd.f32 0.0, %v1164
        %v1166 = vpop.f32.mrf.mxu0
        %v1167 = vpop.f32.mrf.mxu0
        %v1168 = vadd.f32 0.0, %v1167
        %v1169 = vpop.f32.mrf.mxu0
        %1170 = vmatprep.mubr.bf16.mxu0 %v969
        %1171 = vmatmul.mubr.bf16.gmra.mxu0 %v968
        %v1172 = vpop.f32.mrf.mxu0
        %v1173 = vadd.f32 0.0, %v1172
        %v1174 = vpop.f32.mrf.mxu0
        %v1175 = vpop.f32.mrf.mxu0
        %v1176 = vadd.f32 0.0, %v1175
        %v1177 = vpop.f32.mrf.mxu0
        %1178 = vmatprep.mubr.bf16.mxu0 %v971
        %1179 = vmatmul.mubr.bf16.gmra.mxu0 %v970
        %v1180 = vpop.f32.mrf.mxu0
        %v1181 = vadd.f32 0.0, %v1180
        %v1182 = vpop.f32.mrf.mxu0
        %v1183 = vpop.f32.mrf.mxu0
        %v1184 = vadd.f32 0.0, %v1183
        %v1185 = vpop.f32.mrf.mxu0
        %1186 = vmatprep.mubr.bf16.mxu0 %v973
        %1187 = vmatmul.mubr.bf16.gmra.mxu0 %v972
        %v1188 = vpop.f32.mrf.mxu0
        %v1189 = vadd.f32 0.0, %v1188
        %v1190 = vpop.f32.mrf.mxu0
        %v1191 = vpop.f32.mrf.mxu0
        %v1192 = vadd.f32 0.0, %v1191
        %v1193 = vpop.f32.mrf.mxu0
        %1194 = vmatprep.mubr.bf16.mxu0 %v975
        %1195 = vmatmul.mubr.bf16.gmra.mxu0 %v974
        %v1196 = vpop.f32.mrf.mxu0
        %v1197 = vadd.f32 0.0, %v1196
        %v1198 = vpop.f32.mrf.mxu0
        %v1199 = vpop.f32.mrf.mxu0
        %v1200 = vadd.f32 0.0, %v1199
        %v1201 = vpop.f32.mrf.mxu0
        %1202 = vmatprep.mubr.bf16.mxu0 %v977
        %1203 = vmatmul.mubr.bf16.gmra.mxu0 %v976
        %v1204 = vpop.f32.mrf.mxu0
        %v1205 = vadd.f32 0.0, %v1204
        %v1206 = vpop.f32.mrf.mxu0
        %v1207 = vpop.f32.mrf.mxu0
        %v1208 = vadd.f32 0.0, %v1207
        %v1209 = vpop.f32.mrf.mxu0
        %1210 = vmatprep.mubr.bf16.mxu0 %v979
        %1211 = vmatmul.mubr.bf16.gmra.mxu0 %v978
        %v1212 = vpop.f32.mrf.mxu0
        %v1213 = vadd.f32 0.0, %v1212
        %v1214 = vpop.f32.mrf.mxu0
        %v1215 = vpop.f32.mrf.mxu0
        %v1216 = vadd.f32 0.0, %v1215
        %v1217 = vpop.f32.mrf.mxu0
        %1218 = vmatprep.mubr.bf16.mxu0 %v981
        %1219 = vmatmul.mubr.bf16.gmra.mxu0 %v980
        %v1220 = vpop.f32.mrf.mxu0
        %v1221 = vadd.f32 0.0, %v1220
        %v1222 = vpop.f32.mrf.mxu0
        %v1223 = vpop.f32.mrf.mxu0
        %v1224 = vadd.f32 0.0, %v1223
        %v1225 = vpop.f32.mrf.mxu0
        %1226 = vmatprep.mubr.bf16.mxu0 %v983
        %1227 = vmatmul.mubr.bf16.gmra.mxu0 %v982
        %v1228 = vpop.f32.mrf.mxu0
        %v1229 = vadd.f32 0.0, %v1228
        %v1230 = vpop.f32.mrf.mxu0
        %v1231 = vpop.f32.mrf.mxu0
        %v1232 = vadd.f32 0.0, %v1231
        %v1233 = vpop.f32.mrf.mxu0
        %1234 = vmatprep.mubr.bf16.mxu0 %v985
        %1235 = vmatmul.mubr.bf16.gmra.mxu0 %v984
        %v1236 = vpop.f32.mrf.mxu0
        %v1237 = vadd.f32 0.0, %v1236
        %v1238 = vpop.f32.mrf.mxu0
        %v1239 = vpop.f32.mrf.mxu0
        %v1240 = vadd.f32 0.0, %v1239
        %v1241 = vpop.f32.mrf.mxu0
        %1242 = vdwg.mxu0
        %v1243 = vadd.f32 %v922, %v1117
        %v1244 = vadd.f32 %v923, %v1120
        %v1245 = vadd.f32 %v924, %v1125
        %v1246 = vadd.f32 %v925, %v1128
        %v1247 = vadd.f32 %v926, %v1133
        %v1248 = vadd.f32 %v927, %v1136
        %v1249 = vadd.f32 %v928, %v1141
        %v1250 = vadd.f32 %v929, %v1144
        %v1251 = vadd.f32 %v930, %v1149
        %v1252 = vadd.f32 %v931, %v1152
        %v1253 = vadd.f32 %v932, %v1157
        %v1254 = vadd.f32 %v933, %v1160
        %v1255 = vadd.f32 %v934, %v1165
        %v1256 = vadd.f32 %v935, %v1168
        %v1257 = vadd.f32 %v936, %v1173
        %v1258 = vadd.f32 %v937, %v1176
        %v1259 = vadd.f32 %v938, %v1181
        %v1260 = vadd.f32 %v939, %v1184
        %v1261 = vadd.f32 %v940, %v1189
        %v1262 = vadd.f32 %v941, %v1192
        %v1263 = vadd.f32 %v942, %v1197
        %v1264 = vadd.f32 %v943, %v1200
        %v1265 = vadd.f32 %v944, %v1205
        %v1266 = vadd.f32 %v945, %v1208
        %v1267 = vadd.f32 %v946, %v1213
        %v1268 = vadd.f32 %v947, %v1216
        %v1269 = vadd.f32 %v948, %v1221
        %v1270 = vadd.f32 %v949, %v1224
        %v1271 = vadd.f32 %v950, %v1229
        %v1272 = vadd.f32 %v951, %v1232
        %v1273 = vadd.f32 %v952, %v1237
        %v1274 = vadd.f32 %v953, %v1240
        %1275 = vst [vmem:[#allocation2] sm:$0xff] %v1243
        %1276 = vst [vmem:[#allocation2 + $0x8] sm:$0xff] %v1244
        %1277 = vst [vmem:[#allocation2 + $0x10] sm:$0xff] %v1245
        %1278 = vst [vmem:[#allocation2 + $0x18] sm:$0xff] %v1246
        %1279 = vst [vmem:[#allocation2 + $0x20] sm:$0xff] %v1247
        %1280 = vst [vmem:[#allocation2 + $0x28] sm:$0xff] %v1248
        %1281 = vst [vmem:[#allocation2 + $0x30] sm:$0xff] %v1249
        %1282 = vst [vmem:[#allocation2 + $0x38] sm:$0xff] %v1250
        %1283 = vst [vmem:[#allocation2 + $0x40] sm:$0xff] %v1251
        %1284 = vst [vmem:[#allocation2 + $0x48] sm:$0xff] %v1252
        %1285 = vst [vmem:[#allocation2 + $0x50] sm:$0xff] %v1253
        %1286 = vst [vmem:[#allocation2 + $0x58] sm:$0xff] %v1254
        %1287 = vst [vmem:[#allocation2 + $0x60] sm:$0xff] %v1255
        %1288 = vst [vmem:[#allocation2 + $0x68] sm:$0xff] %v1256
        %1289 = vst [vmem:[#allocation2 + $0x70] sm:$0xff] %v1257
        %1290 = vst [vmem:[#allocation2 + $0x78] sm:$0xff] %v1258
        %1291 = vst [vmem:[#allocation2 + $0x80] sm:$0xff] %v1259
        %1292 = vst [vmem:[#allocation2 + $0x88] sm:$0xff] %v1260
        %1293 = vst [vmem:[#allocation2 + $0x90] sm:$0xff] %v1261
        %1294 = vst [vmem:[#allocation2 + $0x98] sm:$0xff] %v1262
        %1295 = vst [vmem:[#allocation2 + $0xa0] sm:$0xff] %v1263
        %1296 = vst [vmem:[#allocation2 + $0xa8] sm:$0xff] %v1264
        %1297 = vst [vmem:[#allocation2 + $0xb0] sm:$0xff] %v1265
        %1298 = vst [vmem:[#allocation2 + $0xb8] sm:$0xff] %v1266
        %1299 = vst [vmem:[#allocation2 + $0xc0] sm:$0xff] %v1267
        %1300 = vst [vmem:[#allocation2 + $0xc8] sm:$0xff] %v1268
        %1301 = vst [vmem:[#allocation2 + $0xd0] sm:$0xff] %v1269
        %1302 = vst [vmem:[#allocation2 + $0xd8] sm:$0xff] %v1270
        %1303 = vst [vmem:[#allocation2 + $0xe0] sm:$0xff] %v1271
        %1304 = vst [vmem:[#allocation2 + $0xe8] sm:$0xff] %v1272
        %1305 = vst [vmem:[#allocation2 + $0xf0] sm:$0xff] %v1273
        %1306 = vst [vmem:[#allocation2 + $0xf8] sm:$0xff] %v1274
        %p1307 = scmp.eq.s32.totalorder %s25, 1
        // Predicated region
        $region45: #{mlp_pallas.1} parent=39 // pred_check
          %p1308 = pneg %p1307
        $region46: #{mlp_pallas.1} parent=39 // pred_check_branch
          %1310 = sbr.rel (%p1308) target = $region48
        $region47: #{mlp_pallas.1} parent=39 // pred_region
          %s1311 = sld [smem:[#allocation3]]
          %v1312 = vld [vmem:[#allocation2] sm:$0xff]
          %v1313 = vld [vmem:[#allocation2 + $0x8] sm:$0xff]
          %v1314 = vld [vmem:[#allocation2 + $0x10] sm:$0xff]
          %v1315 = vld [vmem:[#allocation2 + $0x18] sm:$0xff]
          %v1316 = vld [vmem:[#allocation2 + $0x20] sm:$0xff]
          %v1317 = vld [vmem:[#allocation2 + $0x28] sm:$0xff]
          %v1318 = vld [vmem:[#allocation2 + $0x30] sm:$0xff]
          %v1319 = vld [vmem:[#allocation2 + $0x38] sm:$0xff]
          %v1320 = vld [vmem:[#allocation2 + $0x40] sm:$0xff]
          %v1321 = vld [vmem:[#allocation2 + $0x48] sm:$0xff]
          %v1322 = vld [vmem:[#allocation2 + $0x50] sm:$0xff]
          %v1323 = vld [vmem:[#allocation2 + $0x58] sm:$0xff]
          %v1324 = vld [vmem:[#allocation2 + $0x60] sm:$0xff]
          %v1325 = vld [vmem:[#allocation2 + $0x68] sm:$0xff]
          %v1326 = vld [vmem:[#allocation2 + $0x70] sm:$0xff]
          %v1327 = vld [vmem:[#allocation2 + $0x78] sm:$0xff]
          %v1328 = vld [vmem:[#allocation2 + $0x80] sm:$0xff]
          %v1329 = vld [vmem:[#allocation2 + $0x88] sm:$0xff]
          %v1330 = vld [vmem:[#allocation2 + $0x90] sm:$0xff]
          %v1331 = vld [vmem:[#allocation2 + $0x98] sm:$0xff]
          %v1332 = vld [vmem:[#allocation2 + $0xa0] sm:$0xff]
          %v1333 = vld [vmem:[#allocation2 + $0xa8] sm:$0xff]
          %v1334 = vld [vmem:[#allocation2 + $0xb0] sm:$0xff]
          %v1335 = vld [vmem:[#allocation2 + $0xb8] sm:$0xff]
          %v1336 = vld [vmem:[#allocation2 + $0xc0] sm:$0xff]
          %v1337 = vld [vmem:[#allocation2 + $0xc8] sm:$0xff]
          %v1338 = vld [vmem:[#allocation2 + $0xd0] sm:$0xff]
          %v1339 = vld [vmem:[#allocation2 + $0xd8] sm:$0xff]
          %v1340 = vld [vmem:[#allocation2 + $0xe0] sm:$0xff]
          %v1341 = vld [vmem:[#allocation2 + $0xe8] sm:$0xff]
          %v1342 = vld [vmem:[#allocation2 + $0xf0] sm:$0xff]
          %v1343 = vld [vmem:[#allocation2 + $0xf8] sm:$0xff]
          %v1344 = vstv %s1311
          %v1345 = vmul.f32 %v1344, %v1312
          %v1346 = vmul.f32 %v1344, %v1313
          %v1347 = vmul.f32 %v1344, %v1314
          %v1348 = vmul.f32 %v1344, %v1315
          %v1349 = vmul.f32 %v1344, %v1316
          %v1350 = vmul.f32 %v1344, %v1317
          %v1351 = vmul.f32 %v1344, %v1318
          %v1352 = vmul.f32 %v1344, %v1319
          %v1353 = vmul.f32 %v1344, %v1320
          %v1354 = vmul.f32 %v1344, %v1321
          %v1355 = vmul.f32 %v1344, %v1322
          %v1356 = vmul.f32 %v1344, %v1323
          %v1357 = vmul.f32 %v1344, %v1324
          %v1358 = vmul.f32 %v1344, %v1325
          %v1359 = vmul.f32 %v1344, %v1326
          %v1360 = vmul.f32 %v1344, %v1327
          %v1361 = vmul.f32 %v1344, %v1328
          %v1362 = vmul.f32 %v1344, %v1329
          %v1363 = vmul.f32 %v1344, %v1330
          %v1364 = vmul.f32 %v1344, %v1331
          %v1365 = vmul.f32 %v1344, %v1332
          %v1366 = vmul.f32 %v1344, %v1333
          %v1367 = vmul.f32 %v1344, %v1334
          %v1368 = vmul.f32 %v1344, %v1335
          %v1369 = vmul.f32 %v1344, %v1336
          %v1370 = vmul.f32 %v1344, %v1337
          %v1371 = vmul.f32 %v1344, %v1338
          %v1372 = vmul.f32 %v1344, %v1339
          %v1373 = vmul.f32 %v1344, %v1340
          %v1374 = vmul.f32 %v1344, %v1341
          %v1375 = vmul.f32 %v1344, %v1342
          %v1376 = vmul.f32 %v1344, %v1343
          %v1377 = vld [vmem:[%s4] sm:$0x1]
          %v1379 = vlaneseq
          %v1380 = vshrl.u32 %v1379, 7
          %v1381 = vsub.s32 0, %v1380
          %v1382 = vrot.slane %v1377, %v1381
          %v1384 = vadd.f32 %v1345, %v1382
          %v1385 = vadd.f32 %v1346, %v1382
          %v1386 = vadd.f32 %v1347, %v1382
          %v1387 = vadd.f32 %v1348, %v1382
          %v1388 = vadd.f32 %v1349, %v1382
          %v1389 = vadd.f32 %v1350, %v1382
          %v1390 = vadd.f32 %v1351, %v1382
          %v1391 = vadd.f32 %v1352, %v1382
          %v1392 = vadd.f32 %v1353, %v1382
          %v1393 = vadd.f32 %v1354, %v1382
          %v1394 = vadd.f32 %v1355, %v1382
          %v1395 = vadd.f32 %v1356, %v1382
          %v1396 = vadd.f32 %v1357, %v1382
          %v1397 = vadd.f32 %v1358, %v1382
          %v1398 = vadd.f32 %v1359, %v1382
          %v1399 = vadd.f32 %v1360, %v1382
          %v1400 = vadd.f32 %v1361, %v1382
          %v1401 = vadd.f32 %v1362, %v1382
          %v1402 = vadd.f32 %v1363, %v1382
          %v1403 = vadd.f32 %v1364, %v1382
          %v1404 = vadd.f32 %v1365, %v1382
          %v1405 = vadd.f32 %v1366, %v1382
          %v1406 = vadd.f32 %v1367, %v1382
          %v1407 = vadd.f32 %v1368, %v1382
          %v1408 = vadd.f32 %v1369, %v1382
          %v1409 = vadd.f32 %v1370, %v1382
          %v1410 = vadd.f32 %v1371, %v1382
          %v1411 = vadd.f32 %v1372, %v1382
          %v1412 = vadd.f32 %v1373, %v1382
          %v1413 = vadd.f32 %v1374, %v1382
          %v1414 = vadd.f32 %v1375, %v1382
          %v1415 = vadd.f32 %v1376, %v1382
          %1416 = vst [vmem:[%s231] sm:$0xff] %v1384
          %1417 = vst [vmem:[%s231 + $0x8] sm:$0xff] %v1385
          %1418 = vst [vmem:[%s231 + $0x10] sm:$0xff] %v1386
          %1419 = vst [vmem:[%s231 + $0x18] sm:$0xff] %v1387
          %1420 = vst [vmem:[%s231 + $0x20] sm:$0xff] %v1388
          %1421 = vst [vmem:[%s231 + $0x28] sm:$0xff] %v1389
          %1422 = vst [vmem:[%s231 + $0x30] sm:$0xff] %v1390
          %1423 = vst [vmem:[%s231 + $0x38] sm:$0xff] %v1391
          %1424 = vst [vmem:[%s231 + $0x40] sm:$0xff] %v1392
          %1425 = vst [vmem:[%s231 + $0x48] sm:$0xff] %v1393
          %1426 = vst [vmem:[%s231 + $0x50] sm:$0xff] %v1394
          %1427 = vst [vmem:[%s231 + $0x58] sm:$0xff] %v1395
          %1428 = vst [vmem:[%s231 + $0x60] sm:$0xff] %v1396
          %1429 = vst [vmem:[%s231 + $0x68] sm:$0xff] %v1397
          %1430 = vst [vmem:[%s231 + $0x70] sm:$0xff] %v1398
          %1431 = vst [vmem:[%s231 + $0x78] sm:$0xff] %v1399
          %1432 = vst [vmem:[%s231 + $0x80] sm:$0xff] %v1400
          %1433 = vst [vmem:[%s231 + $0x88] sm:$0xff] %v1401
          %1434 = vst [vmem:[%s231 + $0x90] sm:$0xff] %v1402
          %1435 = vst [vmem:[%s231 + $0x98] sm:$0xff] %v1403
          %1436 = vst [vmem:[%s231 + $0xa0] sm:$0xff] %v1404
          %1437 = vst [vmem:[%s231 + $0xa8] sm:$0xff] %v1405
          %1438 = vst [vmem:[%s231 + $0xb0] sm:$0xff] %v1406
          %1439 = vst [vmem:[%s231 + $0xb8] sm:$0xff] %v1407
          %1440 = vst [vmem:[%s231 + $0xc0] sm:$0xff] %v1408
          %1441 = vst [vmem:[%s231 + $0xc8] sm:$0xff] %v1409
          %1442 = vst [vmem:[%s231 + $0xd0] sm:$0xff] %v1410
          %1443 = vst [vmem:[%s231 + $0xd8] sm:$0xff] %v1411
          %1444 = vst [vmem:[%s231 + $0xe0] sm:$0xff] %v1412
          %1445 = vst [vmem:[%s231 + $0xe8] sm:$0xff] %v1413
          %1446 = vst [vmem:[%s231 + $0xf0] sm:$0xff] %v1414
          %1447 = vst [vmem:[%s231 + $0xf8] sm:$0xff] %v1415
        $region48: #{mlp_pallas.1} parent=39 // pred_fallthru
          _
        %s1448 = sand.u32 %s150, 1
        %s1449 = scalar_lea.sflag [#allocation5], %s1448
        %s1450 = sand.u32 %s150, 1
        %s1451 = smul.addr %s1450, 256
        %s1452 = scalar_lea.vmem [#allocation4], %s1451
        // Predicated region
        $region49: #{mlp_pallas.1} parent=39 // pred_check
          %p1453 = pneg %p160
        $region50: #{mlp_pallas.1} parent=39 // pred_check_branch
          %1455 = sbr.rel (%p1453) target = $region52
        $region51: #{mlp_pallas.1} parent=39 // pred_region
          %s1456 = smul.u32 32, %s24
          %s1458 = ssub.s32 4096, 4096
          %1459 = vsyncadd %s1449, %s1458
          %s1460 = smul.addr %s1456, 128
          %s1461 = scalar_lea.hbm %s5, %s1460
          %s1462 = sshll.u32 %s1452, 4
          %s1463 = int_to_ptr.vmem [resolvable:$true] %s1462
          %1468 = dma.vmem_to_hbm [thread:$0]  %s1463, 4096, %s1461, %s1449, 128, 128, 8
        $region52: #{mlp_pallas.1} parent=39 // pred_fallthru
          _
      $region40: #{mlp_pallas.1} parent=5 // pred_fallthru
        _
      %p1469 = scmp.le.s32.totalorder 2, %s15
      // Predicated region
      $region53: #{mlp_pallas.1} parent=5 // pred_check
        %p1470 = pneg %p1469
      $region54: #{mlp_pallas.1} parent=5 // pred_check_branch
        %1472 = sbr.rel (%p1470) target = $region56
      $region55: #{mlp_pallas.1} parent=5 // pred_region
        %s1473 = ssub.s32 %s15, 2
        // Predicated region
        $region57: #{mlp_pallas.1} parent=55 // pred_check
          %p1474 = pneg %p166
        $region58: #{mlp_pallas.1} parent=55 // pred_check_branch
          %1476 = sbr.rel (%p1474) target = $region60
        $region59: #{mlp_pallas.1} parent=55 // pred_region
          %s1477 = sand.u32 %s151, 1
          %s1478 = scalar_lea.sflag [#allocation5], %s1477
          %s1479 = sand.u32 %s151, 1
          %s1480 = smul.addr %s1479, 256
          %s1481 = scalar_lea.vmem [#allocation4], %s1480
          %1482 = dma.done %s1478, 4096
        $region60: #{mlp_pallas.1} parent=55 // pred_fallthru
          _
      $region56: #{mlp_pallas.1} parent=5 // pred_fallthru
        _
    $region6: #{mlp_pallas.1} parent=1 // loop_footer
      %s19 = sadd.s32 1, %s15
    $region7: #{mlp_pallas.1} parent=1 // loop_footer_branch
      %14 = sbr.rel target = $region3
    $region8: #{mlp_pallas.1} parent=1 // loop_exit
      _
    %1483 = vsyncpa [#allocation5], 1
    %s1484 = scalar_lea.sflag [#allocation5], 1
    %1485 = vsyncpa %s1484, 1

</llo_original>
